<compile_context>
chip_gen: v7x
topology: tpu7x:2x2x1
jax: 0.10.0
libtpu: 0.0.40
codegen_flags: <defaults>
</compile_context>

<pallas_src>
import math

import jax
import jax.numpy as jnp
from jax.experimental import pallas as pl
from jax.experimental.pallas import tpu as pltpu


# -----------------------------------------------------------------------------
# Fused encoder-layer kernel (one grid step == one block of B_blk batch rows)
# -----------------------------------------------------------------------------
def make_encoder_layer_kernel(b_blk, seq_len, d_model, n_heads, head_dim, eps):
    M = b_blk * seq_len
    D = d_model

    def kernel(x_ref, ln1_a_ref, ln1_b_ref, wqkv_ref, wo_ref,
               ln2_a_ref, ln2_b_ref, w1_ref, w2_ref, o_ref, attn_sc):
        # Fold the batch block into the matmul M dimension.
        x = x_ref[...].astype(jnp.float32).reshape(M, D)          # (M, D) f32

        def layer_norm(v, a, b):
            # torch reference: a * (x - mean) / (std_unbiased + eps) + b
            # (std uses ddof=1; eps added to std, not variance).  Exact divide
            # here so LN parity with the f32 reference stays tight.
            mean = jnp.mean(v, axis=-1, keepdims=True)
            diff = v - mean
            var = jnp.sum(diff * diff, axis=-1, keepdims=True) * (1.0 / (D - 1))
            return a * (diff / (jnp.sqrt(var) + eps)) + b

        xn = layer_norm(x,
                        ln1_a_ref[...].astype(jnp.float32),
                        ln1_b_ref[...].astype(jnp.float32))       # (M, D) f32

        # ---- fused QKV projection: one (M,D)x(D,3D) MXU pass, bf16 operands,
        #      f32 accumulation.  1/sqrt(head_dim) is pre-folded into q-columns.
        qkv = jnp.dot(xn.astype(jnp.bfloat16), wqkv_ref[...],
                      preferred_element_type=jnp.float32)         # (M, 3D) f32
        q = qkv[:, :D].astype(jnp.bfloat16).reshape(b_blk, seq_len, D)
        k = qkv[:, D:2 * D].astype(jnp.bfloat16).reshape(b_blk, seq_len, D)
        v = qkv[:, 2 * D:].astype(jnp.bfloat16).reshape(b_blk, seq_len, D)

        # ---- per-head attention, batched over the b_blk rows of this tile.
        # dot_general contracts head_dim directly (no materialized k.T); each
        # head's context is written straight into the VMEM scratch slice, so
        # there is no lane-dim concat and per-head temporaries die immediately.
        # (encoder layer: no causal mask; attn_dropout p=0 -> identity)
        for h in range(n_heads):
            sl = slice(h * head_dim, (h + 1) * head_dim)
            s = jnp.einsum("bqd,bkd->bqk", q[:, :, sl], k[:, :, sl],
                           preferred_element_type=jnp.float32)    # (b, T, T) f32
            m = jnp.max(s, axis=-1, keepdims=True)
            p = jnp.exp(s - m)
            p = p * pl.reciprocal(jnp.sum(p, axis=-1, keepdims=True),
                                  approx=True)                    # EUP slot
            ctx = jnp.einsum("bqk,bkd->bqd", p.astype(jnp.bfloat16), v[:, :, sl],
                             preferred_element_type=jnp.float32)  # (b, T, hd)
            attn_sc[:, :, sl] = ctx.astype(jnp.bfloat16)

        # Output projection: one wide K=D matmul (not per-head K=head_dim).
        attn = jnp.dot(attn_sc[...].reshape(M, D), wo_ref[...],
                       preferred_element_type=jnp.float32)        # (M, D) f32

        h_res = xn + attn      # residual on the *normed* x (matches the module)

        hn = layer_norm(h_res,
                        ln2_a_ref[...].astype(jnp.float32),
                        ln2_b_ref[...].astype(jnp.float32))

        h1 = jnp.maximum(jnp.dot(hn.astype(jnp.bfloat16), w1_ref[...],
                                 preferred_element_type=jnp.float32), 0.0)
        mlp = jnp.dot(h1.astype(jnp.bfloat16), w2_ref[...],
                      preferred_element_type=jnp.float32)

        # TODO(synk): dropout layers are identity here (eval / p=0.0 semantics).
        o_ref[...] = (h_res + mlp).reshape(b_blk, seq_len, D).astype(o_ref.dtype)

    return kernel


def _choose_batch_block(B, T, target_rows=256):
    """Largest divisor of B with b_blk*T <= ~target_rows (fattens the MXU M
    dimension), while keeping >= 2 grid steps so both v7x TCs get work."""
    best = 1
    for cand in range(1, B + 1):
        if B % cand != 0:
            continue
        steps = B // cand
        if cand * T <= max(target_rows, T) and (steps >= 2 or B == 1):
            best = cand
    return best


def encoder_layer_forward(x, params, n_heads, eps=1e-6):
    B, T, D = x.shape
    head_dim = D // n_heads
    H = params["w1"].shape[1]
    b_blk = _choose_batch_block(B, T)
    kernel = make_encoder_layer_kernel(b_blk, T, D, n_heads, head_dim, eps)

    def wspec(shape):
        # Grid-invariant weight tile (index_map constant across the grid).
        # NOTE: at realistic D/H add pipeline_mode=pl.Buffered(1) here (single
        # buffer) and/or stream W1/W2 over an extra grid axis to stay inside
        # v7x's 64 MiB VMEM; unnecessary at these demo shapes.
        return pl.BlockSpec(shape, lambda b: tuple(0 for _ in shape))

    return pl.pallas_call(
        kernel,
        out_shape=jax.ShapeDtypeStruct((B, T, D), x.dtype),
        grid=(B // b_blk,),
        in_specs=[
            pl.BlockSpec((b_blk, T, D), lambda b: (b, 0, 0)),   # x (batch block)
            wspec((1, D)), wspec((1, D)),                       # LN1 gamma / beta
            wspec((D, 3 * D)), wspec((D, D)),                   # Wqkv, Wo
            wspec((1, D)), wspec((1, D)),                       # LN2 gamma / beta
            wspec((D, H)), wspec((H, D)),                       # W1, W2
        ],
        out_specs=pl.BlockSpec((b_blk, T, D), lambda b: (b, 0, 0)),
        scratch_shapes=[pltpu.VMEM((b_blk, T, D), jnp.bfloat16)],  # attn ctx
        compiler_params=pltpu.CompilerParams(
            dimension_semantics=("parallel",),        # megacore on v7x
            vmem_limit_bytes=64 * 1024 * 1024,        # explicit scoped-VMEM cap
        ),
    )(x,
      params["ln1_a"].reshape(1, D), params["ln1_b"].reshape(1, D),
      params["wqkv"], params["wo"],
      params["ln2_a"].reshape(1, D), params["ln2_b"].reshape(1, D),
      params["w1"], params["w2"])


# -----------------------------------------------------------------------------
# Pure-JAX f32 reference (mirrors the torch EncoderLayer forward exactly)
# -----------------------------------------------------------------------------
def encoder_layer_reference(x, p, n_heads, eps=1e-6):
    def ln(v, a, b):
        mean = jnp.mean(v, axis=-1, keepdims=True)
        diff = v - mean
        var = jnp.sum(diff * diff, axis=-1, keepdims=True) / (v.shape[-1] - 1)
        return a * diff / (jnp.sqrt(var) + eps) + b

    B, T, D = x.shape
    hd = D // n_heads
    xn = ln(x, p["ln1_a"], p["ln1_b"])
    q = (xn @ p["wq"]).reshape(B, T, n_heads, hd).transpose(0, 2, 1, 3)
    k = (xn @ p["wk"]).reshape(B, T, n_heads, hd).transpose(0, 2, 1, 3)
    v = (xn @ p["wv"]).reshape(B, T, n_heads, hd).transpose(0, 2, 1, 3)
    s = (q @ jnp.swapaxes(k, -1, -2)) / math.sqrt(hd)
    a = jax.nn.softmax(s, axis=-1)
    o = (a @ v).transpose(0, 2, 1, 3).reshape(B, T, D) @ p["wo"]
    h = xn + o
    hn = ln(h, p["ln2_a"], p["ln2_b"])
    return h + jnp.maximum(hn @ p["w1"], 0.0) @ p["w2"]


# -----------------------------------------------------------------------------
if __name__ == "__main__":
    D = 128         # n_embd == dim (multiple of 128 -> lane-dense stores)
    n_heads = 4     # head_dim = 32
    B, T = 2, 8
    eps = 1e-6

    key = jax.random.PRNGKey(0)
    ks = jax.random.split(key, 11)
    x = jax.random.normal(ks[0], (B, T, D), jnp.float32)

    def lin(k, d_in, d_out):
        # stored as (in, out); equivalent to torch Linear weight (out, in) transposed
        return jax.random.normal(k, (d_in, d_out), jnp.float32) * 0.02

    wq = lin(ks[1], D, D)
    wk = lin(ks[2], D, D)
    wv = lin(ks[3], D, D)
    wo = lin(ks[4], D, D)
    w1 = lin(ks[5], D, D)       # MLP(dim, dim, dropout) -> hidden == dim
    w2 = lin(ks[6], D, D)
    ln1_a = 1.0 + 0.1 * jax.random.normal(ks[7], (D,), jnp.float32)
    ln1_b = 0.02 * jax.random.normal(ks[8], (D,), jnp.float32)
    ln2_a = 1.0 + 0.05 * jax.random.normal(ks[9], (D,), jnp.float32)
    ln2_b = 0.01 * jax.random.normal(ks[10], (D,), jnp.float32)

    scale = 1.0 / math.sqrt(D // n_heads)
    params = {
        "ln1_a": ln1_a, "ln1_b": ln1_b,
        # fold 1/sqrt(head_dim) into the q columns, then one fused bf16 weight
        "wqkv": jnp.concatenate([wq * scale, wk, wv], axis=1).astype(jnp.bfloat16),
        "wo": wo.astype(jnp.bfloat16),
        "ln2_a": ln2_a, "ln2_b": ln2_b,
        "w1": w1.astype(jnp.bfloat16),
        "w2": w2.astype(jnp.bfloat16),
    }

    out = encoder_layer_forward(x, params, n_heads, eps)
    out = jax.block_until_ready(out)
    assert out.shape == (B, T, D)

    ref = encoder_layer_reference(
        x, dict(wq=wq, wk=wk, wv=wv, wo=wo, w1=w1, w2=w2,
                ln1_a=ln1_a, ln1_b=ln1_b, ln2_a=ln2_a, ln2_b=ln2_b),
        n_heads, eps)
    max_err = float(jnp.max(jnp.abs(out - ref)))
    assert max_err < 5e-2, f"mismatch vs reference: max abs err = {max_err}"

    print("KERNEL_OK")
</pallas_src>

<mosaic_0001>
module attributes {stable_mosaic.version = 11 : i64} {
  func.func @kernel(%arg0: i32, %arg1: memref<1x8x128xf32, #tpu.memory_space<vmem>>, %arg2: memref<1x128xf32, #tpu.memory_space<vmem>>, %arg3: memref<1x128xf32, #tpu.memory_space<vmem>>, %arg4: memref<128x384xbf16, #tpu.memory_space<vmem>>, %arg5: memref<128x128xbf16, #tpu.memory_space<vmem>>, %arg6: memref<1x128xf32, #tpu.memory_space<vmem>>, %arg7: memref<1x128xf32, #tpu.memory_space<vmem>>, %arg8: memref<128x128xbf16, #tpu.memory_space<vmem>>, %arg9: memref<128x128xbf16, #tpu.memory_space<vmem>>, %arg10: memref<1x8x128xf32, #tpu.memory_space<vmem>>, %arg11: memref<1x8x128xbf16, #tpu.memory_space<vmem>>) attributes {dimension_semantics = [#tpu.dimension_semantics<parallel>], iteration_bounds = array<i64: 2>, scalar_prefetch = 0 : i64, scratch_operands = 1 : i64, tpu.core_type = #tpu.core_type<tc>, window_params = [{transform_indices = @transform_0, window_bounds = array<i64: 1, 8, 128>}, {pipeline_mode = #tpu.pipeline_mode<synchronous>, transform_indices = @transform_1, window_bounds = array<i64: 1, 128>}, {pipeline_mode = #tpu.pipeline_mode<synchronous>, transform_indices = @transform_2, window_bounds = array<i64: 1, 128>}, {pipeline_mode = #tpu.pipeline_mode<synchronous>, transform_indices = @transform_3, window_bounds = array<i64: 128, 384>}, {pipeline_mode = #tpu.pipeline_mode<synchronous>, transform_indices = @transform_4, window_bounds = array<i64: 128, 128>}, {pipeline_mode = #tpu.pipeline_mode<synchronous>, transform_indices = @transform_5, window_bounds = array<i64: 1, 128>}, {pipeline_mode = #tpu.pipeline_mode<synchronous>, transform_indices = @transform_6, window_bounds = array<i64: 1, 128>}, {pipeline_mode = #tpu.pipeline_mode<synchronous>, transform_indices = @transform_7, window_bounds = array<i64: 128, 128>}, {pipeline_mode = #tpu.pipeline_mode<synchronous>, transform_indices = @transform_8, window_bounds = array<i64: 128, 128>}, {transform_indices = @transform_9, window_bounds = array<i64: 1, 8, 128>}]} {
    %c0 = arith.constant 0 : index
    %c0_0 = arith.constant 0 : index
    %c0_1 = arith.constant 0 : index
    %0 = vector.load %arg1[%c0, %c0_0, %c0_1] : memref<1x8x128xf32, #tpu.memory_space<vmem>>, vector<1x8x128xf32>
    %1 = vector.shape_cast %0 : vector<1x8x128xf32> to vector<8x128xf32>
    %c0_2 = arith.constant 0 : index
    %c0_3 = arith.constant 0 : index
    %2 = vector.load %arg2[%c0_2, %c0_3] : memref<1x128xf32, #tpu.memory_space<vmem>>, vector<1x128xf32>
    %c0_4 = arith.constant 0 : index
    %c0_5 = arith.constant 0 : index
    %3 = vector.load %arg3[%c0_4, %c0_5] : memref<1x128xf32, #tpu.memory_space<vmem>>, vector<1x128xf32>
    %cst = arith.constant dense<0.000000e+00> : vector<8xf32>
    %4 = vector.multi_reduction <add>, %1, %cst [1] : vector<8x128xf32> to vector<8xf32>
    %5 = vector.shape_cast %4 : vector<8xf32> to vector<8x1xf32>
    %cst_6 = arith.constant 1.280000e+02 : f32
    %6 = vector.broadcast %cst_6 : f32 to vector<8x1xf32>
    %7 = arith.divf %5, %6 : vector<8x1xf32>
    %8 = vector.broadcast %7 : vector<8x1xf32> to vector<8x128xf32>
    %9 = arith.subf %1, %8 : vector<8x128xf32>
    %10 = arith.mulf %9, %9 : vector<8x128xf32>
    %cst_7 = arith.constant dense<0.000000e+00> : vector<8xf32>
    %11 = vector.multi_reduction <add>, %10, %cst_7 [1] : vector<8x128xf32> to vector<8xf32>
    %12 = vector.shape_cast %11 : vector<8xf32> to vector<8x1xf32>
    %cst_8 = arith.constant 0.00787401571 : f32
    %13 = vector.broadcast %cst_8 : f32 to vector<8x1xf32>
    %14 = arith.mulf %12, %13 : vector<8x1xf32>
    %15 = math.sqrt %14 : vector<8x1xf32>
    %cst_9 = arith.constant 9.99999997E-7 : f32
    %16 = vector.broadcast %cst_9 : f32 to vector<8x1xf32>
    %17 = arith.addf %15, %16 : vector<8x1xf32>
    %18 = vector.broadcast %17 : vector<8x1xf32> to vector<8x128xf32>
    %19 = arith.divf %9, %18 : vector<8x128xf32>
    %20 = vector.broadcast %2 : vector<1x128xf32> to vector<8x128xf32>
    %21 = arith.mulf %20, %19 : vector<8x128xf32>
    %22 = vector.broadcast %3 : vector<1x128xf32> to vector<8x128xf32>
    %23 = arith.addf %21, %22 : vector<8x128xf32>
    %24 = arith.truncf %23 : vector<8x128xf32> to vector<8x128xbf16>
    %c0_10 = arith.constant 0 : index
    %c0_11 = arith.constant 0 : index
    %25 = vector.load %arg4[%c0_10, %c0_11] : memref<128x384xbf16, #tpu.memory_space<vmem>>, vector<128x384xbf16>
    %cst_12 = arith.constant dense<0.000000e+00> : vector<8x384xf32>
    %26 = tpu.matmul %24, %25, %cst_12 {dimension_numbers = #tpu.dot_dimension_numbers<[1], [0], [0], [1], [0, 0, 1, 1], [], []>} : vector<8x128xbf16>, vector<128x384xbf16>, vector<8x384xf32> -> vector<8x384xf32>
    %27 = vector.extract_strided_slice %26 {offsets = [0, 0], sizes = [8, 128], strides = [1, 1]} : vector<8x384xf32> to vector<8x128xf32>
    %28 = arith.truncf %27 : vector<8x128xf32> to vector<8x128xbf16>
    %29 = vector.shape_cast %28 : vector<8x128xbf16> to vector<1x8x128xbf16>
    %30 = vector.extract_strided_slice %26 {offsets = [0, 128], sizes = [8, 128], strides = [1, 1]} : vector<8x384xf32> to vector<8x128xf32>
    %31 = arith.truncf %30 : vector<8x128xf32> to vector<8x128xbf16>
    %32 = vector.shape_cast %31 : vector<8x128xbf16> to vector<1x8x128xbf16>
    %33 = vector.extract_strided_slice %26 {offsets = [0, 256], sizes = [8, 128], strides = [1, 1]} : vector<8x384xf32> to vector<8x128xf32>
    %34 = arith.truncf %33 : vector<8x128xf32> to vector<8x128xbf16>
    %35 = vector.shape_cast %34 : vector<8x128xbf16> to vector<1x8x128xbf16>
    %36 = vector.extract_strided_slice %29 {offsets = [0, 0, 0], sizes = [1, 8, 32], strides = [1, 1, 1]} : vector<1x8x128xbf16> to vector<1x8x32xbf16>
    %37 = vector.extract_strided_slice %32 {offsets = [0, 0, 0], sizes = [1, 8, 32], strides = [1, 1, 1]} : vector<1x8x128xbf16> to vector<1x8x32xbf16>
    "tpu.trace_start"() <{level = 10 : i32, message = "bqd,bkd->bqk"}> : () -> ()
    %cst_13 = arith.constant dense<0.000000e+00> : vector<1x8x8xf32>
    %38 = tpu.matmul %36, %37, %cst_13 {dimension_numbers = #tpu.dot_dimension_numbers<[2], [2], [1], [1], [0, 0, 0, 1, 1, 1], [0], [0]>} : vector<1x8x32xbf16>, vector<1x8x32xbf16>, vector<1x8x8xf32> -> vector<1x8x8xf32>
    "tpu.trace_stop"() : () -> ()
    %cst_14 = arith.constant dense<0xFF800000> : vector<1x8xf32>
    %39 = vector.multi_reduction <maximumf>, %38, %cst_14 [2] : vector<1x8x8xf32> to vector<1x8xf32>
    %40 = vector.shape_cast %39 : vector<1x8xf32> to vector<1x8x1xf32>
    %41 = vector.broadcast %40 : vector<1x8x1xf32> to vector<1x8x8xf32>
    %42 = arith.subf %38, %41 : vector<1x8x8xf32>
    %43 = math.exp %42 : vector<1x8x8xf32>
    %cst_15 = arith.constant dense<0.000000e+00> : vector<1x8xf32>
    %44 = vector.multi_reduction <add>, %43, %cst_15 [2] : vector<1x8x8xf32> to vector<1x8xf32>
    %45 = vector.shape_cast %44 : vector<1x8xf32> to vector<1x8x1xf32>
    %46 = tpu.reciprocal %45 {approx = true} : vector<1x8x1xf32> -> vector<1x8x1xf32>
    %47 = vector.broadcast %46 : vector<1x8x1xf32> to vector<1x8x8xf32>
    %48 = arith.mulf %43, %47 : vector<1x8x8xf32>
    %49 = arith.truncf %48 : vector<1x8x8xf32> to vector<1x8x8xbf16>
    %50 = vector.extract_strided_slice %35 {offsets = [0, 0, 0], sizes = [1, 8, 32], strides = [1, 1, 1]} : vector<1x8x128xbf16> to vector<1x8x32xbf16>
    "tpu.trace_start"() <{level = 10 : i32, message = "bqk,bkd->bqd"}> : () -> ()
    %cst_16 = arith.constant dense<0.000000e+00> : vector<1x8x32xf32>
    %51 = tpu.matmul %49, %50, %cst_16 {dimension_numbers = #tpu.dot_dimension_numbers<[2], [1], [1], [2], [0, 0, 0, 1, 1, 2], [0], [0]>} : vector<1x8x8xbf16>, vector<1x8x32xbf16>, vector<1x8x32xf32> -> vector<1x8x32xf32>
    "tpu.trace_stop"() : () -> ()
    %52 = arith.truncf %51 : vector<1x8x32xf32> to vector<1x8x32xbf16>
    %c0_17 = arith.constant 0 : index
    %c0_18 = arith.constant 0 : index
    %c0_19 = arith.constant 0 : index
    %53 = vector.load %arg11[%c0_17, %c0_18, %c0_19] : memref<1x8x128xbf16, #tpu.memory_space<vmem>>, vector<1x8x32xbf16>
    tpu.vector_store %arg11[%c0_17, %c0_18, %c0_19], %52 {strides = array<i32>} : memref<1x8x128xbf16, #tpu.memory_space<vmem>>, vector<1x8x32xbf16>,
    %54 = vector.extract_strided_slice %29 {offsets = [0, 0, 32], sizes = [1, 8, 32], strides = [1, 1, 1]} : vector<1x8x128xbf16> to vector<1x8x32xbf16>
    %55 = vector.extract_strided_slice %32 {offsets = [0, 0, 32], sizes = [1, 8, 32], strides = [1, 1, 1]} : vector<1x8x128xbf16> to vector<1x8x32xbf16>
    "tpu.trace_start"() <{level = 10 : i32, message = "bqd,bkd->bqk"}> : () -> ()
    %cst_20 = arith.constant dense<0.000000e+00> : vector<1x8x8xf32>
    %56 = tpu.matmul %54, %55, %cst_20 {dimension_numbers = #tpu.dot_dimension_numbers<[2], [2], [1], [1], [0, 0, 0, 1, 1, 1], [0], [0]>} : vector<1x8x32xbf16>, vector<1x8x32xbf16>, vector<1x8x8xf32> -> vector<1x8x8xf32>
    "tpu.trace_stop"() : () -> ()
    %cst_21 = arith.constant dense<0xFF800000> : vector<1x8xf32>
    %57 = vector.multi_reduction <maximumf>, %56, %cst_21 [2] : vector<1x8x8xf32> to vector<1x8xf32>
    %58 = vector.shape_cast %57 : vector<1x8xf32> to vector<1x8x1xf32>
    %59 = vector.broadcast %58 : vector<1x8x1xf32> to vector<1x8x8xf32>
    %60 = arith.subf %56, %59 : vector<1x8x8xf32>
    %61 = math.exp %60 : vector<1x8x8xf32>
    %cst_22 = arith.constant dense<0.000000e+00> : vector<1x8xf32>
    %62 = vector.multi_reduction <add>, %61, %cst_22 [2] : vector<1x8x8xf32> to vector<1x8xf32>
    %63 = vector.shape_cast %62 : vector<1x8xf32> to vector<1x8x1xf32>
    %64 = tpu.reciprocal %63 {approx = true} : vector<1x8x1xf32> -> vector<1x8x1xf32>
    %65 = vector.broadcast %64 : vector<1x8x1xf32> to vector<1x8x8xf32>
    %66 = arith.mulf %61, %65 : vector<1x8x8xf32>
    %67 = arith.truncf %66 : vector<1x8x8xf32> to vector<1x8x8xbf16>
    %68 = vector.extract_strided_slice %35 {offsets = [0, 0, 32], sizes = [1, 8, 32], strides = [1, 1, 1]} : vector<1x8x128xbf16> to vector<1x8x32xbf16>
    "tpu.trace_start"() <{level = 10 : i32, message = "bqk,bkd->bqd"}> : () -> ()
    %cst_23 = arith.constant dense<0.000000e+00> : vector<1x8x32xf32>
    %69 = tpu.matmul %67, %68, %cst_23 {dimension_numbers = #tpu.dot_dimension_numbers<[2], [1], [1], [2], [0, 0, 0, 1, 1, 2], [0], [0]>} : vector<1x8x8xbf16>, vector<1x8x32xbf16>, vector<1x8x32xf32> -> vector<1x8x32xf32>
    "tpu.trace_stop"() : () -> ()
    %70 = arith.truncf %69 : vector<1x8x32xf32> to vector<1x8x32xbf16>
    %c0_24 = arith.constant 0 : index
    %c0_25 = arith.constant 0 : index
    %c32 = arith.constant 32 : index
    %71 = vector.load %arg11[%c0_24, %c0_25, %c32] : memref<1x8x128xbf16, #tpu.memory_space<vmem>>, vector<1x8x32xbf16>
    tpu.vector_store %arg11[%c0_24, %c0_25, %c32], %70 {strides = array<i32>} : memref<1x8x128xbf16, #tpu.memory_space<vmem>>, vector<1x8x32xbf16>,
    %72 = vector.extract_strided_slice %29 {offsets = [0, 0, 64], sizes = [1, 8, 32], strides = [1, 1, 1]} : vector<1x8x128xbf16> to vector<1x8x32xbf16>
    %73 = vector.extract_strided_slice %32 {offsets = [0, 0, 64], sizes = [1, 8, 32], strides = [1, 1, 1]} : vector<1x8x128xbf16> to vector<1x8x32xbf16>
    "tpu.trace_start"() <{level = 10 : i32, message = "bqd,bkd->bqk"}> : () -> ()
    %cst_26 = arith.constant dense<0.000000e+00> : vector<1x8x8xf32>
    %74 = tpu.matmul %72, %73, %cst_26 {dimension_numbers = #tpu.dot_dimension_numbers<[2], [2], [1], [1], [0, 0, 0, 1, 1, 1], [0], [0]>} : vector<1x8x32xbf16>, vector<1x8x32xbf16>, vector<1x8x8xf32> -> vector<1x8x8xf32>
    "tpu.trace_stop"() : () -> ()
    %cst_27 = arith.constant dense<0xFF800000> : vector<1x8xf32>
    %75 = vector.multi_reduction <maximumf>, %74, %cst_27 [2] : vector<1x8x8xf32> to vector<1x8xf32>
    %76 = vector.shape_cast %75 : vector<1x8xf32> to vector<1x8x1xf32>
    %77 = vector.broadcast %76 : vector<1x8x1xf32> to vector<1x8x8xf32>
    %78 = arith.subf %74, %77 : vector<1x8x8xf32>
    %79 = math.exp %78 : vector<1x8x8xf32>
    %cst_28 = arith.constant dense<0.000000e+00> : vector<1x8xf32>
    %80 = vector.multi_reduction <add>, %79, %cst_28 [2] : vector<1x8x8xf32> to vector<1x8xf32>
    %81 = vector.shape_cast %80 : vector<1x8xf32> to vector<1x8x1xf32>
    %82 = tpu.reciprocal %81 {approx = true} : vector<1x8x1xf32> -> vector<1x8x1xf32>
    %83 = vector.broadcast %82 : vector<1x8x1xf32> to vector<1x8x8xf32>
    %84 = arith.mulf %79, %83 : vector<1x8x8xf32>
    %85 = arith.truncf %84 : vector<1x8x8xf32> to vector<1x8x8xbf16>
    %86 = vector.extract_strided_slice %35 {offsets = [0, 0, 64], sizes = [1, 8, 32], strides = [1, 1, 1]} : vector<1x8x128xbf16> to vector<1x8x32xbf16>
    "tpu.trace_start"() <{level = 10 : i32, message = "bqk,bkd->bqd"}> : () -> ()
    %cst_29 = arith.constant dense<0.000000e+00> : vector<1x8x32xf32>
    %87 = tpu.matmul %85, %86, %cst_29 {dimension_numbers = #tpu.dot_dimension_numbers<[2], [1], [1], [2], [0, 0, 0, 1, 1, 2], [0], [0]>} : vector<1x8x8xbf16>, vector<1x8x32xbf16>, vector<1x8x32xf32> -> vector<1x8x32xf32>
    "tpu.trace_stop"() : () -> ()
    %88 = arith.truncf %87 : vector<1x8x32xf32> to vector<1x8x32xbf16>
    %c0_30 = arith.constant 0 : index
    %c0_31 = arith.constant 0 : index
    %c64 = arith.constant 64 : index
    %89 = vector.load %arg11[%c0_30, %c0_31, %c64] : memref<1x8x128xbf16, #tpu.memory_space<vmem>>, vector<1x8x32xbf16>
    tpu.vector_store %arg11[%c0_30, %c0_31, %c64], %88 {strides = array<i32>} : memref<1x8x128xbf16, #tpu.memory_space<vmem>>, vector<1x8x32xbf16>,
    %90 = vector.extract_strided_slice %29 {offsets = [0, 0, 96], sizes = [1, 8, 32], strides = [1, 1, 1]} : vector<1x8x128xbf16> to vector<1x8x32xbf16>
    %91 = vector.extract_strided_slice %32 {offsets = [0, 0, 96], sizes = [1, 8, 32], strides = [1, 1, 1]} : vector<1x8x128xbf16> to vector<1x8x32xbf16>
    "tpu.trace_start"() <{level = 10 : i32, message = "bqd,bkd->bqk"}> : () -> ()
    %cst_32 = arith.constant dense<0.000000e+00> : vector<1x8x8xf32>
    %92 = tpu.matmul %90, %91, %cst_32 {dimension_numbers = #tpu.dot_dimension_numbers<[2], [2], [1], [1], [0, 0, 0, 1, 1, 1], [0], [0]>} : vector<1x8x32xbf16>, vector<1x8x32xbf16>, vector<1x8x8xf32> -> vector<1x8x8xf32>
    "tpu.trace_stop"() : () -> ()
    %cst_33 = arith.constant dense<0xFF800000> : vector<1x8xf32>
    %93 = vector.multi_reduction <maximumf>, %92, %cst_33 [2] : vector<1x8x8xf32> to vector<1x8xf32>
    %94 = vector.shape_cast %93 : vector<1x8xf32> to vector<1x8x1xf32>
    %95 = vector.broadcast %94 : vector<1x8x1xf32> to vector<1x8x8xf32>
    %96 = arith.subf %92, %95 : vector<1x8x8xf32>
    %97 = math.exp %96 : vector<1x8x8xf32>
    %cst_34 = arith.constant dense<0.000000e+00> : vector<1x8xf32>
    %98 = vector.multi_reduction <add>, %97, %cst_34 [2] : vector<1x8x8xf32> to vector<1x8xf32>
    %99 = vector.shape_cast %98 : vector<1x8xf32> to vector<1x8x1xf32>
    %100 = tpu.reciprocal %99 {approx = true} : vector<1x8x1xf32> -> vector<1x8x1xf32>
    %101 = vector.broadcast %100 : vector<1x8x1xf32> to vector<1x8x8xf32>
    %102 = arith.mulf %97, %101 : vector<1x8x8xf32>
    %103 = arith.truncf %102 : vector<1x8x8xf32> to vector<1x8x8xbf16>
    %104 = vector.extract_strided_slice %35 {offsets = [0, 0, 96], sizes = [1, 8, 32], strides = [1, 1, 1]} : vector<1x8x128xbf16> to vector<1x8x32xbf16>
    "tpu.trace_start"() <{level = 10 : i32, message = "bqk,bkd->bqd"}> : () -> ()
    %cst_35 = arith.constant dense<0.000000e+00> : vector<1x8x32xf32>
    %105 = tpu.matmul %103, %104, %cst_35 {dimension_numbers = #tpu.dot_dimension_numbers<[2], [1], [1], [2], [0, 0, 0, 1, 1, 2], [0], [0]>} : vector<1x8x8xbf16>, vector<1x8x32xbf16>, vector<1x8x32xf32> -> vector<1x8x32xf32>
    "tpu.trace_stop"() : () -> ()
    %106 = arith.truncf %105 : vector<1x8x32xf32> to vector<1x8x32xbf16>
    %c0_36 = arith.constant 0 : index
    %c0_37 = arith.constant 0 : index
    %c96 = arith.constant 96 : index
    %107 = vector.load %arg11[%c0_36, %c0_37, %c96] : memref<1x8x128xbf16, #tpu.memory_space<vmem>>, vector<1x8x32xbf16>
    tpu.vector_store %arg11[%c0_36, %c0_37, %c96], %106 {strides = array<i32>} : memref<1x8x128xbf16, #tpu.memory_space<vmem>>, vector<1x8x32xbf16>,
    %c0_38 = arith.constant 0 : index
    %c0_39 = arith.constant 0 : index
    %c0_40 = arith.constant 0 : index
    %108 = vector.load %arg11[%c0_38, %c0_39, %c0_40] : memref<1x8x128xbf16, #tpu.memory_space<vmem>>, vector<1x8x128xbf16>
    %109 = vector.shape_cast %108 : vector<1x8x128xbf16> to vector<8x128xbf16>
    %c0_41 = arith.constant 0 : index
    %c0_42 = arith.constant 0 : index
    %110 = vector.load %arg5[%c0_41, %c0_42] : memref<128x128xbf16, #tpu.memory_space<vmem>>, vector<128x128xbf16>
    %cst_43 = arith.constant dense<0.000000e+00> : vector<8x128xf32>
    %111 = tpu.matmul %109, %110, %cst_43 {dimension_numbers = #tpu.dot_dimension_numbers<[1], [0], [0], [1], [0, 0, 1, 1], [], []>} : vector<8x128xbf16>, vector<128x128xbf16>, vector<8x128xf32> -> vector<8x128xf32>
    %112 = arith.addf %23, %111 : vector<8x128xf32>
    %c0_44 = arith.constant 0 : index
    %c0_45 = arith.constant 0 : index
    %113 = vector.load %arg6[%c0_44, %c0_45] : memref<1x128xf32, #tpu.memory_space<vmem>>, vector<1x128xf32>
    %c0_46 = arith.constant 0 : index
    %c0_47 = arith.constant 0 : index
    %114 = vector.load %arg7[%c0_46, %c0_47] : memref<1x128xf32, #tpu.memory_space<vmem>>, vector<1x128xf32>
    %cst_48 = arith.constant dense<0.000000e+00> : vector<8xf32>
    %115 = vector.multi_reduction <add>, %112, %cst_48 [1] : vector<8x128xf32> to vector<8xf32>
    %116 = vector.shape_cast %115 : vector<8xf32> to vector<8x1xf32>
    %cst_49 = arith.constant 1.280000e+02 : f32
    %117 = vector.broadcast %cst_49 : f32 to vector<8x1xf32>
    %118 = arith.divf %116, %117 : vector<8x1xf32>
    %119 = vector.broadcast %118 : vector<8x1xf32> to vector<8x128xf32>
    %120 = arith.subf %112, %119 : vector<8x128xf32>
    %121 = arith.mulf %120, %120 : vector<8x128xf32>
    %cst_50 = arith.constant dense<0.000000e+00> : vector<8xf32>
    %122 = vector.multi_reduction <add>, %121, %cst_50 [1] : vector<8x128xf32> to vector<8xf32>
    %123 = vector.shape_cast %122 : vector<8xf32> to vector<8x1xf32>
    %cst_51 = arith.constant 0.00787401571 : f32
    %124 = vector.broadcast %cst_51 : f32 to vector<8x1xf32>
    %125 = arith.mulf %123, %124 : vector<8x1xf32>
    %126 = math.sqrt %125 : vector<8x1xf32>
    %cst_52 = arith.constant 9.99999997E-7 : f32
    %127 = vector.broadcast %cst_52 : f32 to vector<8x1xf32>
    %128 = arith.addf %126, %127 : vector<8x1xf32>
    %129 = vector.broadcast %128 : vector<8x1xf32> to vector<8x128xf32>
    %130 = arith.divf %120, %129 : vector<8x128xf32>
    %131 = vector.broadcast %113 : vector<1x128xf32> to vector<8x128xf32>
    %132 = arith.mulf %131, %130 : vector<8x128xf32>
    %133 = vector.broadcast %114 : vector<1x128xf32> to vector<8x128xf32>
    %134 = arith.addf %132, %133 : vector<8x128xf32>
    %135 = arith.truncf %134 : vector<8x128xf32> to vector<8x128xbf16>
    %c0_53 = arith.constant 0 : index
    %c0_54 = arith.constant 0 : index
    %136 = vector.load %arg8[%c0_53, %c0_54] : memref<128x128xbf16, #tpu.memory_space<vmem>>, vector<128x128xbf16>
    %cst_55 = arith.constant dense<0.000000e+00> : vector<8x128xf32>
    %137 = tpu.matmul %135, %136, %cst_55 {dimension_numbers = #tpu.dot_dimension_numbers<[1], [0], [0], [1], [0, 0, 1, 1], [], []>} : vector<8x128xbf16>, vector<128x128xbf16>, vector<8x128xf32> -> vector<8x128xf32>
    %cst_56 = arith.constant 0.000000e+00 : f32
    %138 = vector.broadcast %cst_56 : f32 to vector<8x128xf32>
    %139 = arith.maximumf %137, %138 : vector<8x128xf32>
    %140 = arith.truncf %139 : vector<8x128xf32> to vector<8x128xbf16>
    %c0_57 = arith.constant 0 : index
    %c0_58 = arith.constant 0 : index
    %141 = vector.load %arg9[%c0_57, %c0_58] : memref<128x128xbf16, #tpu.memory_space<vmem>>, vector<128x128xbf16>
    %cst_59 = arith.constant dense<0.000000e+00> : vector<8x128xf32>
    %142 = tpu.matmul %140, %141, %cst_59 {dimension_numbers = #tpu.dot_dimension_numbers<[1], [0], [0], [1], [0, 0, 1, 1], [], []>} : vector<8x128xbf16>, vector<128x128xbf16>, vector<8x128xf32> -> vector<8x128xf32>
    %143 = arith.addf %112, %142 : vector<8x128xf32>
    %144 = vector.shape_cast %143 : vector<8x128xf32> to vector<1x8x128xf32>
    %c0_60 = arith.constant 0 : index
    %c0_61 = arith.constant 0 : index
    %c0_62 = arith.constant 0 : index
    %145 = vector.load %arg10[%c0_60, %c0_61, %c0_62] : memref<1x8x128xf32, #tpu.memory_space<vmem>>, vector<1x8x128xf32>
    tpu.vector_store %arg10[%c0_60, %c0_61, %c0_62], %144 {strides = array<i32>} : memref<1x8x128xf32, #tpu.memory_space<vmem>>, vector<1x8x128xf32>,
    return
  }
  func.func @transform_0(%arg0: i32) -> (i32, i32, i32) {
    %c0_i32 = arith.constant 0 : i32
    %c0_i32_0 = arith.constant 0 : i32
    %c0_i32_1 = arith.constant 0 : i32
    return %arg0, %c0_i32, %c0_i32_0 : i32, i32, i32
  }
  func.func @transform_1(%arg0: i32) -> (i32, i32) {
    %c0_i32 = arith.constant 0 : i32
    %c0_i32_0 = arith.constant 0 : i32
    %c0_i32_1 = arith.constant 0 : i32
    return %c0_i32, %c0_i32_0 : i32, i32
  }
  func.func @transform_2(%arg0: i32) -> (i32, i32) {
    %c0_i32 = arith.constant 0 : i32
    %c0_i32_0 = arith.constant 0 : i32
    %c0_i32_1 = arith.constant 0 : i32
    return %c0_i32, %c0_i32_0 : i32, i32
  }
  func.func @transform_3(%arg0: i32) -> (i32, i32) {
    %c0_i32 = arith.constant 0 : i32
    %c0_i32_0 = arith.constant 0 : i32
    %c0_i32_1 = arith.constant 0 : i32
    return %c0_i32, %c0_i32_0 : i32, i32
  }
  func.func @transform_4(%arg0: i32) -> (i32, i32) {
    %c0_i32 = arith.constant 0 : i32
    %c0_i32_0 = arith.constant 0 : i32
    %c0_i32_1 = arith.constant 0 : i32
    return %c0_i32, %c0_i32_0 : i32, i32
  }
  func.func @transform_5(%arg0: i32) -> (i32, i32) {
    %c0_i32 = arith.constant 0 : i32
    %c0_i32_0 = arith.constant 0 : i32
    %c0_i32_1 = arith.constant 0 : i32
    return %c0_i32, %c0_i32_0 : i32, i32
  }
  func.func @transform_6(%arg0: i32) -> (i32, i32) {
    %c0_i32 = arith.constant 0 : i32
    %c0_i32_0 = arith.constant 0 : i32
    %c0_i32_1 = arith.constant 0 : i32
    return %c0_i32, %c0_i32_0 : i32, i32
  }
  func.func @transform_7(%arg0: i32) -> (i32, i32) {
    %c0_i32 = arith.constant 0 : i32
    %c0_i32_0 = arith.constant 0 : i32
    %c0_i32_1 = arith.constant 0 : i32
    return %c0_i32, %c0_i32_0 : i32, i32
  }
  func.func @transform_8(%arg0: i32) -> (i32, i32) {
    %c0_i32 = arith.constant 0 : i32
    %c0_i32_0 = arith.constant 0 : i32
    %c0_i32_1 = arith.constant 0 : i32
    return %c0_i32, %c0_i32_0 : i32, i32
  }
  func.func @transform_9(%arg0: i32) -> (i32, i32, i32) {
    %c0_i32 = arith.constant 0 : i32
    %c0_i32_0 = arith.constant 0 : i32
    %c0_i32_1 = arith.constant 0 : i32
    return %arg0, %c0_i32, %c0_i32_0 : i32, i32, i32
  }
}

</mosaic_0001>

<llo_original>
// kernel: tpu_custom_call.1
$region0: #{tpu_custom_call.1}
  #allocation0 [shape = 'u32[]', space=smem, size = 0x4, offset = 0x4, fixed_abs, tag = 'smem constant byte address 0x4 - core index']
  #allocation1 [shape = 'u32[144,128]{1,0:T(1,128)}', space=vmem, size = 0x12000, scoped, tag = 'internal scratch']
  #allocation2 [shape = 'bf16[1,8,128]{2,1,0:T(8,128)(2,1)}', space=vmem, size = 0x800, scoped, tag = 'scratch operand']
  %s0 = inlined_call_operand.hbm [shape: f32[2,8,128], index: 0, kind: input, shape index: {}]
  %s1 = inlined_call_operand.hbm [shape: f32[1,128], index: 1, kind: input, shape index: {}]
  %s2 = inlined_call_operand.hbm [shape: f32[1,128], index: 2, kind: input, shape index: {}]
  %s3 = inlined_call_operand.hbm [shape: bf16[128,384], index: 3, kind: input, shape index: {}]
  %s4 = inlined_call_operand.hbm [shape: bf16[128,128], index: 4, kind: input, shape index: {}]
  %s5 = inlined_call_operand.hbm [shape: f32[1,128], index: 5, kind: input, shape index: {}]
  %s6 = inlined_call_operand.hbm [shape: f32[1,128], index: 6, kind: input, shape index: {}]
  %s7 = inlined_call_operand.hbm [shape: bf16[128,128], index: 7, kind: input, shape index: {}]
  %s8 = inlined_call_operand.hbm [shape: bf16[128,128], index: 8, kind: input, shape index: {}]
  %s9 = inlined_call_operand.hbm [shape: f32[2,8,128], index: 9, kind: output, shape index: {}]
  %s10 = sld [smem:[#allocation0]]
  $region105: #{tpu_custom_call.1} parent=0
    _
  %s12 = ssub.s32 1, %s10
  %s13 = scalar_select 0, %s12, %s10
  $region1: #{tpu_custom_call.1} parent=0
    #allocation3 [shape = 'u8[8192]{0}', space=vmem, size = 0x2000, scoped, tag = 'input window, operand 0']
    #allocation4 [shape = 's32[2]{0}', space=sflag, size = 0x8, scoped, tag = 'scoped memory for tpu_custom_call.1']
    #allocation5 [shape = 's32[2]{0}', space=sflag, size = 0x8, scoped, tag = 'scoped memory for tpu_custom_call.1']
    #allocation6 [shape = 'u8[512]{0}', space=vmem, size = 0x400, scoped, tag = 'input window, operand 1, single buffered']
    #allocation7 [shape = 's32[1]{0}', space=sflag, size = 0x4, scoped, tag = 'scoped memory for tpu_custom_call.1']
    #allocation8 [shape = 'u8[512]{0}', space=vmem, size = 0x400, scoped, tag = 'input window, operand 2, single buffered']
    #allocation9 [shape = 'u8[98304]{0}', space=vmem, size = 0x18000, scoped, tag = 'input window, operand 3, single buffered']
    #allocation10 [shape = 's32[1]{0}', space=sflag, size = 0x4, scoped, tag = 'scoped memory for tpu_custom_call.1']
    #allocation11 [shape = 'u8[32768]{0}', space=vmem, size = 0x8000, scoped, tag = 'input window, operand 4, single buffered']
    #allocation12 [shape = 'u8[512]{0}', space=vmem, size = 0x400, scoped, tag = 'input window, operand 5, single buffered']
    #allocation13 [shape = 's32[1]{0}', space=sflag, size = 0x4, scoped, tag = 'scoped memory for tpu_custom_call.1']
    #allocation14 [shape = 'u8[512]{0}', space=vmem, size = 0x400, scoped, tag = 'input window, operand 6, single buffered']
    #allocation15 [shape = 'u8[32768]{0}', space=vmem, size = 0x8000, scoped, tag = 'input window, operand 7, single buffered']
    #allocation16 [shape = 's32[1]{0}', space=sflag, size = 0x4, scoped, tag = 'scoped memory for tpu_custom_call.1']
    #allocation17 [shape = 'u8[32768]{0}', space=vmem, size = 0x8000, scoped, tag = 'input window, operand 8, single buffered']
    #allocation18 [shape = 'u8[8192]{0}', space=vmem, size = 0x2000, scoped, tag = 'output window, operand 0']
    %14 = vsyncpa [#allocation4], 0
    %s15 = scalar_lea.sflag [#allocation4], 1
    %16 = vsyncpa %s15, 0
    %17 = vsyncpa [#allocation7], 0
    %18 = vsyncpa [#allocation10], 0
    %19 = vsyncpa [#allocation13], 0
    %20 = vsyncpa [#allocation16], 0
    %21 = vsyncpa [#allocation5], 0
    %s22 = scalar_lea.sflag [#allocation5], 1
    %23 = vsyncpa %s22, 0
    loop: start=0, step=1, limit=4
    $region2: #{tpu_custom_call.1} parent=1 // loop_pre_header
      _
    $region3: #{tpu_custom_call.1} parent=1 // loop_header
      %s25 = sphi 0, %s29
      %p26 = scmp.ge.s32.totalorder %s25, 4
      %s35 = sphi 0, %s37
      %s38 = sphi 0, %s35
      %s39 = sphi 0, %s38
      %s55 = sphi 0, %s39
      %s59 = sphi 0, %s59
      %s61 = sphi 0, %s59
      %s62 = sphi 0, %s61
      %s76 = sphi 0, %s62
      %s80 = sphi 0, %s80
      %s82 = sphi 0, %s80
      %s83 = sphi 0, %s82
      %s97 = sphi 0, %s83
      %s101 = sphi 0, %s101
      %s103 = sphi 0, %s101
      %s104 = sphi 0, %s103
      %s118 = sphi 0, %s104
      %s122 = sphi 0, %s122
      %s124 = sphi 0, %s122
      %s125 = sphi 0, %s124
      %s139 = sphi 0, %s125
      %s143 = sphi 0, %s143
      %s145 = sphi 0, %s143
      %s146 = sphi 0, %s145
      %s160 = sphi 0, %s146
      %s164 = sphi 0, %s164
      %s166 = sphi 0, %s164
      %s167 = sphi 0, %s166
      %s181 = sphi 0, %s167
      %s185 = sphi 0, %s185
      %s187 = sphi 0, %s185
      %s188 = sphi 0, %s187
      %s202 = sphi 0, %s188
      %s206 = sphi 0, %s206
      %s208 = sphi 0, %s206
      %s209 = sphi 0, %s208
      %s223 = sphi 0, %s209
      %s229 = sphi 0, %s231
      %s232 = sphi 0, %s229
      %s233 = sphi 0, %s232
      %s249 = sphi 0, %s233
    $region4: #{tpu_custom_call.1} parent=1 // loop_header_branch
      %28 = sbr.rel (%p26) target = $region8
    $region5: #{tpu_custom_call.1} parent=1 // loop_body
      %s30 = ssub.s32 %s25, 1
      %s31 = ssub.s32 %s25, 2
      %s32 = sadd.s32 %s25, 1
      %s33 = ssub.s32 %s25, %s32
      %p34 = scmp.eq.s32.totalorder %s33, 0
      %s36 = sadd.s32 %s35, 1
      %s37 = scalar_select %p34, %s35, %s36
      %p40 = pneg %p34
      %p41 = scmp.eq.s32.totalorder %s25, 1
      %p42 = por %p40, %p41
      %p43 = scmp.ne.s32.totalorder %s35, %s38
      %p44 = scmp.eq.s32.totalorder %s25, 0
      %p45 = por %p43, %p44
      %p46 = scmp.ne.s32.totalorder %s35, %s38
      %p47 = scmp.eq.s32.totalorder %s30, 1
      %p48 = por %p46, %p47
      %p49 = scmp.ne.s32.totalorder %s38, %s39
      %p50 = scmp.eq.s32.totalorder %s30, 0
      %p51 = por %p49, %p50
      %p52 = scmp.ne.s32.totalorder %s38, %s39
      %p53 = scmp.eq.s32.totalorder %s31, 1
      %p54 = por %p52, %p53
      %p56 = scmp.ne.s32.totalorder %s39, %s55
      %p57 = scmp.eq.s32.totalorder %s31, 0
      %p58 = por %p56, %p57
      %s60 = sadd.s32 %s59, 1
      %p63 = scmp.eq.s32.totalorder %s25, 1
      %p64 = scmp.ne.s32.totalorder %s59, %s61
      %p65 = scmp.eq.s32.totalorder %s25, 0
      %p66 = por %p64, %p65
      %p67 = scmp.ne.s32.totalorder %s59, %s61
      %p68 = scmp.eq.s32.totalorder %s30, 1
      %p69 = por %p67, %p68
      %p70 = scmp.ne.s32.totalorder %s61, %s62
      %p71 = scmp.eq.s32.totalorder %s30, 0
      %p72 = por %p70, %p71
      %p73 = scmp.ne.s32.totalorder %s61, %s62
      %p74 = scmp.eq.s32.totalorder %s31, 1
      %p75 = por %p73, %p74
      %p77 = scmp.ne.s32.totalorder %s62, %s76
      %p78 = scmp.eq.s32.totalorder %s31, 0
      %p79 = por %p77, %p78
      %s81 = sadd.s32 %s80, 1
      %p84 = scmp.eq.s32.totalorder %s25, 1
      %p85 = scmp.ne.s32.totalorder %s80, %s82
      %p86 = scmp.eq.s32.totalorder %s25, 0
      %p87 = por %p85, %p86
      %p88 = scmp.ne.s32.totalorder %s80, %s82
      %p89 = scmp.eq.s32.totalorder %s30, 1
      %p90 = por %p88, %p89
      %p91 = scmp.ne.s32.totalorder %s82, %s83
      %p92 = scmp.eq.s32.totalorder %s30, 0
      %p93 = por %p91, %p92
      %p94 = scmp.ne.s32.totalorder %s82, %s83
      %p95 = scmp.eq.s32.totalorder %s31, 1
      %p96 = por %p94, %p95
      %p98 = scmp.ne.s32.totalorder %s83, %s97
      %p99 = scmp.eq.s32.totalorder %s31, 0
      %p100 = por %p98, %p99
      %s102 = sadd.s32 %s101, 1
      %p105 = scmp.eq.s32.totalorder %s25, 1
      %p106 = scmp.ne.s32.totalorder %s101, %s103
      %p107 = scmp.eq.s32.totalorder %s25, 0
      %p108 = por %p106, %p107
      %p109 = scmp.ne.s32.totalorder %s101, %s103
      %p110 = scmp.eq.s32.totalorder %s30, 1
      %p111 = por %p109, %p110
      %p112 = scmp.ne.s32.totalorder %s103, %s104
      %p113 = scmp.eq.s32.totalorder %s30, 0
      %p114 = por %p112, %p113
      %p115 = scmp.ne.s32.totalorder %s103, %s104
      %p116 = scmp.eq.s32.totalorder %s31, 1
      %p117 = por %p115, %p116
      %p119 = scmp.ne.s32.totalorder %s104, %s118
      %p120 = scmp.eq.s32.totalorder %s31, 0
      %p121 = por %p119, %p120
      %s123 = sadd.s32 %s122, 1
      %p126 = scmp.eq.s32.totalorder %s25, 1
      %p127 = scmp.ne.s32.totalorder %s122, %s124
      %p128 = scmp.eq.s32.totalorder %s25, 0
      %p129 = por %p127, %p128
      %p130 = scmp.ne.s32.totalorder %s122, %s124
      %p131 = scmp.eq.s32.totalorder %s30, 1
      %p132 = por %p130, %p131
      %p133 = scmp.ne.s32.totalorder %s124, %s125
      %p134 = scmp.eq.s32.totalorder %s30, 0
      %p135 = por %p133, %p134
      %p136 = scmp.ne.s32.totalorder %s124, %s125
      %p137 = scmp.eq.s32.totalorder %s31, 1
      %p138 = por %p136, %p137
      %p140 = scmp.ne.s32.totalorder %s125, %s139
      %p141 = scmp.eq.s32.totalorder %s31, 0
      %p142 = por %p140, %p141
      %s144 = sadd.s32 %s143, 1
      %p147 = scmp.eq.s32.totalorder %s25, 1
      %p148 = scmp.ne.s32.totalorder %s143, %s145
      %p149 = scmp.eq.s32.totalorder %s25, 0
      %p150 = por %p148, %p149
      %p151 = scmp.ne.s32.totalorder %s143, %s145
      %p152 = scmp.eq.s32.totalorder %s30, 1
      %p153 = por %p151, %p152
      %p154 = scmp.ne.s32.totalorder %s145, %s146
      %p155 = scmp.eq.s32.totalorder %s30, 0
      %p156 = por %p154, %p155
      %p157 = scmp.ne.s32.totalorder %s145, %s146
      %p158 = scmp.eq.s32.totalorder %s31, 1
      %p159 = por %p157, %p158
      %p161 = scmp.ne.s32.totalorder %s146, %s160
      %p162 = scmp.eq.s32.totalorder %s31, 0
      %p163 = por %p161, %p162
      %s165 = sadd.s32 %s164, 1
      %p168 = scmp.eq.s32.totalorder %s25, 1
      %p169 = scmp.ne.s32.totalorder %s164, %s166
      %p170 = scmp.eq.s32.totalorder %s25, 0
      %p171 = por %p169, %p170
      %p172 = scmp.ne.s32.totalorder %s164, %s166
      %p173 = scmp.eq.s32.totalorder %s30, 1
      %p174 = por %p172, %p173
      %p175 = scmp.ne.s32.totalorder %s166, %s167
      %p176 = scmp.eq.s32.totalorder %s30, 0
      %p177 = por %p175, %p176
      %p178 = scmp.ne.s32.totalorder %s166, %s167
      %p179 = scmp.eq.s32.totalorder %s31, 1
      %p180 = por %p178, %p179
      %p182 = scmp.ne.s32.totalorder %s167, %s181
      %p183 = scmp.eq.s32.totalorder %s31, 0
      %p184 = por %p182, %p183
      %s186 = sadd.s32 %s185, 1
      %p189 = scmp.eq.s32.totalorder %s25, 1
      %p190 = scmp.ne.s32.totalorder %s185, %s187
      %p191 = scmp.eq.s32.totalorder %s25, 0
      %p192 = por %p190, %p191
      %p193 = scmp.ne.s32.totalorder %s185, %s187
      %p194 = scmp.eq.s32.totalorder %s30, 1
      %p195 = por %p193, %p194
      %p196 = scmp.ne.s32.totalorder %s187, %s188
      %p197 = scmp.eq.s32.totalorder %s30, 0
      %p198 = por %p196, %p197
      %p199 = scmp.ne.s32.totalorder %s187, %s188
      %p200 = scmp.eq.s32.totalorder %s31, 1
      %p201 = por %p199, %p200
      %p203 = scmp.ne.s32.totalorder %s188, %s202
      %p204 = scmp.eq.s32.totalorder %s31, 0
      %p205 = por %p203, %p204
      %s207 = sadd.s32 %s206, 1
      %p210 = scmp.eq.s32.totalorder %s25, 1
      %p211 = scmp.ne.s32.totalorder %s206, %s208
      %p212 = scmp.eq.s32.totalorder %s25, 0
      %p213 = por %p211, %p212
      %p214 = scmp.ne.s32.totalorder %s206, %s208
      %p215 = scmp.eq.s32.totalorder %s30, 1
      %p216 = por %p214, %p215
      %p217 = scmp.ne.s32.totalorder %s208, %s209
      %p218 = scmp.eq.s32.totalorder %s30, 0
      %p219 = por %p217, %p218
      %p220 = scmp.ne.s32.totalorder %s208, %s209
      %p221 = scmp.eq.s32.totalorder %s31, 1
      %p222 = por %p220, %p221
      %p224 = scmp.ne.s32.totalorder %s209, %s223
      %p225 = scmp.eq.s32.totalorder %s31, 0
      %p226 = por %p224, %p225
      %s227 = ssub.s32 %s25, %s32
      %p228 = scmp.eq.s32.totalorder %s227, 0
      %s230 = sadd.s32 %s229, 1
      %s231 = scalar_select %p228, %s229, %s230
      %p234 = pneg %p228
      %p235 = scmp.eq.s32.totalorder %s25, 1
      %p236 = por %p234, %p235
      %p237 = scmp.ne.s32.totalorder %s229, %s232
      %p238 = scmp.eq.s32.totalorder %s25, 0
      %p239 = por %p237, %p238
      %p240 = scmp.ne.s32.totalorder %s229, %s232
      %p241 = scmp.eq.s32.totalorder %s30, 1
      %p242 = por %p240, %p241
      %p243 = scmp.ne.s32.totalorder %s232, %s233
      %p244 = scmp.eq.s32.totalorder %s30, 0
      %p245 = por %p243, %p244
      %p246 = scmp.ne.s32.totalorder %s232, %s233
      %p247 = scmp.eq.s32.totalorder %s31, 1
      %p248 = por %p246, %p247
      %p250 = scmp.ne.s32.totalorder %s233, %s249
      %p251 = scmp.eq.s32.totalorder %s31, 0
      %p252 = por %p250, %p251
      %p253 = scmp.le.s32.totalorder 1, %s25
      %p254 = scmp.lt.s32.totalorder %s25, 3
      %p255 = pnand %p253, %p254
      %p256 = pneg %p255
      // Predicated region
      $region9: #{tpu_custom_call.1} parent=5 // pred_check
        _
      $region10: #{tpu_custom_call.1} parent=5 // pred_check_branch
        %258 = sbr.rel (%p255) target = $region12
      $region11: #{tpu_custom_call.1} parent=5 // pred_region
        %s259 = ssub.s32 %s25, 1
        // Predicated region
        $region13: #{tpu_custom_call.1} parent=11 // pred_check
          %p260 = pneg %p72
        $region14: #{tpu_custom_call.1} parent=11 // pred_check_branch
          %262 = sbr.rel (%p260) target = $region16
        $region15: #{tpu_custom_call.1} parent=11 // pred_region
          %s264 = ssub.s32 16, 16
          %265 = vsyncadd [#allocation7], %s264
          %s267 = sshll.u32 [#allocation6], 4
          %s268 = int_to_ptr.vmem [resolvable:$true] %s267
          %270 = dma.hbm_to_vmem [thread:$0]  %s1, 16, %s268, [#allocation7]
        $region16: #{tpu_custom_call.1} parent=11 // pred_fallthru
          _
        // Predicated region
        $region17: #{tpu_custom_call.1} parent=11 // pred_check
          %p271 = pneg %p93
        $region18: #{tpu_custom_call.1} parent=11 // pred_check_branch
          %273 = sbr.rel (%p271) target = $region20
        $region19: #{tpu_custom_call.1} parent=11 // pred_region
          %s275 = ssub.s32 16, 16
          %276 = vsyncadd [#allocation7], %s275
          %s278 = sshll.u32 [#allocation8], 4
          %s279 = int_to_ptr.vmem [resolvable:$true] %s278
          %281 = dma.hbm_to_vmem [thread:$0]  %s2, 16, %s279, [#allocation7]
        $region20: #{tpu_custom_call.1} parent=11 // pred_fallthru
          _
        // Predicated region
        $region21: #{tpu_custom_call.1} parent=11 // pred_check
          %p282 = pneg %p114
        $region22: #{tpu_custom_call.1} parent=11 // pred_check_branch
          %284 = sbr.rel (%p282) target = $region24
        $region23: #{tpu_custom_call.1} parent=11 // pred_region
          %s286 = ssub.s32 3072, 3072
          %287 = vsyncadd [#allocation10], %s286
          %s288 = sshll.u32 [#allocation9], 4
          %s289 = int_to_ptr.vmem [resolvable:$true] %s288
          %294 = dma.hbm_to_vmem [thread:$0]  %s3, 3072, %s289, [#allocation10], 192, 192, 12
        $region24: #{tpu_custom_call.1} parent=11 // pred_fallthru
          _
        // Predicated region
        $region25: #{tpu_custom_call.1} parent=11 // pred_check
          %p295 = pneg %p135
        $region26: #{tpu_custom_call.1} parent=11 // pred_check_branch
          %297 = sbr.rel (%p295) target = $region28
        $region27: #{tpu_custom_call.1} parent=11 // pred_region
          %s299 = ssub.s32 1024, 1024
          %300 = vsyncadd [#allocation10], %s299
          %s301 = sshll.u32 [#allocation11], 4
          %s302 = int_to_ptr.vmem [resolvable:$true] %s301
          %307 = dma.hbm_to_vmem [thread:$0]  %s4, 1024, %s302, [#allocation10], 64, 64, 4
        $region28: #{tpu_custom_call.1} parent=11 // pred_fallthru
          _
        // Predicated region
        $region29: #{tpu_custom_call.1} parent=11 // pred_check
          %p308 = pneg %p156
        $region30: #{tpu_custom_call.1} parent=11 // pred_check_branch
          %310 = sbr.rel (%p308) target = $region32
        $region31: #{tpu_custom_call.1} parent=11 // pred_region
          %s312 = ssub.s32 16, 16
          %313 = vsyncadd [#allocation13], %s312
          %s315 = sshll.u32 [#allocation12], 4
          %s316 = int_to_ptr.vmem [resolvable:$true] %s315
          %318 = dma.hbm_to_vmem [thread:$0]  %s5, 16, %s316, [#allocation13]
        $region32: #{tpu_custom_call.1} parent=11 // pred_fallthru
          _
        // Predicated region
        $region33: #{tpu_custom_call.1} parent=11 // pred_check
          %p319 = pneg %p177
        $region34: #{tpu_custom_call.1} parent=11 // pred_check_branch
          %321 = sbr.rel (%p319) target = $region36
        $region35: #{tpu_custom_call.1} parent=11 // pred_region
          %s323 = ssub.s32 16, 16
          %324 = vsyncadd [#allocation13], %s323
          %s326 = sshll.u32 [#allocation14], 4
          %s327 = int_to_ptr.vmem [resolvable:$true] %s326
          %329 = dma.hbm_to_vmem [thread:$0]  %s6, 16, %s327, [#allocation13]
        $region36: #{tpu_custom_call.1} parent=11 // pred_fallthru
          _
        // Predicated region
        $region37: #{tpu_custom_call.1} parent=11 // pred_check
          %p330 = pneg %p198
        $region38: #{tpu_custom_call.1} parent=11 // pred_check_branch
          %332 = sbr.rel (%p330) target = $region40
        $region39: #{tpu_custom_call.1} parent=11 // pred_region
          %s334 = ssub.s32 1024, 1024
          %335 = vsyncadd [#allocation16], %s334
          %s336 = sshll.u32 [#allocation15], 4
          %s337 = int_to_ptr.vmem [resolvable:$true] %s336
          %342 = dma.hbm_to_vmem [thread:$0]  %s7, 1024, %s337, [#allocation16], 64, 64, 4
        $region40: #{tpu_custom_call.1} parent=11 // pred_fallthru
          _
        // Predicated region
        $region41: #{tpu_custom_call.1} parent=11 // pred_check
          %p343 = pneg %p219
        $region42: #{tpu_custom_call.1} parent=11 // pred_check_branch
          %345 = sbr.rel (%p343) target = $region44
        $region43: #{tpu_custom_call.1} parent=11 // pred_region
          %s347 = ssub.s32 1024, 1024
          %348 = vsyncadd [#allocation16], %s347
          %s349 = sshll.u32 [#allocation17], 4
          %s350 = int_to_ptr.vmem [resolvable:$true] %s349
          %355 = dma.hbm_to_vmem [thread:$0]  %s8, 1024, %s350, [#allocation16], 64, 64, 4
        $region44: #{tpu_custom_call.1} parent=11 // pred_fallthru
          _
      $region12: #{tpu_custom_call.1} parent=5 // pred_fallthru
        _
      %p356 = scmp.lt.s32.totalorder %s25, 2
      // Predicated region
      $region45: #{tpu_custom_call.1} parent=5 // pred_check
        %p357 = pneg %p356
      $region46: #{tpu_custom_call.1} parent=5 // pred_check_branch
        %359 = sbr.rel (%p357) target = $region48
      $region47: #{tpu_custom_call.1} parent=5 // pred_region
        // Predicated region
        $region49: #{tpu_custom_call.1} parent=47 // pred_check
          %p360 = pneg %p45
        $region50: #{tpu_custom_call.1} parent=47 // pred_check_branch
          %362 = sbr.rel (%p360) target = $region52
        $region51: #{tpu_custom_call.1} parent=47 // pred_region
          %s363 = sand.u32 %s35, 1
          %s364 = scalar_lea.sflag [#allocation4], %s363
          %s365 = sand.u32 %s35, 1
          %s366 = smul.addr %s365, 8
          %s367 = scalar_lea.vmem [#allocation3], %s366
          %s369 = ssub.s32 128, 128
          %370 = vsyncadd %s364, %s369
          %s371 = smul.addr %s25, 128
          %s372 = scalar_lea.hbm %s0, %s371
          %s374 = sshll.u32 %s367, 4
          %s375 = int_to_ptr.vmem [resolvable:$true] %s374
          %377 = dma.hbm_to_vmem [thread:$0]  %s372, 128, %s375, %s364
        $region52: #{tpu_custom_call.1} parent=47 // pred_fallthru
          _
      $region48: #{tpu_custom_call.1} parent=5 // pred_fallthru
        _
      %p378 = scmp.le.s32.totalorder 1, %s25
      %p379 = scmp.lt.s32.totalorder %s25, 3
      %p380 = pnand %p378, %p379
      %p381 = pneg %p380
      // Predicated region
      $region53: #{tpu_custom_call.1} parent=5 // pred_check
        _
      $region54: #{tpu_custom_call.1} parent=5 // pred_check_branch
        %383 = sbr.rel (%p380) target = $region56
      $region55: #{tpu_custom_call.1} parent=5 // pred_region
        %s384 = ssub.s32 %s25, 1
        %s385 = sand.u32 %s38, 1
        %s386 = scalar_lea.sflag [#allocation4], %s385
        %s387 = sand.u32 %s38, 1
        %s388 = smul.addr %s387, 8
        %s389 = scalar_lea.vmem [#allocation3], %s388
        // Predicated region
        $region57: #{tpu_custom_call.1} parent=55 // pred_check
          %p390 = pneg %p51
        $region58: #{tpu_custom_call.1} parent=55 // pred_check_branch
          %392 = sbr.rel (%p390) target = $region60
        $region59: #{tpu_custom_call.1} parent=55 // pred_region
          %393 = dma.done %s386, 128
        $region60: #{tpu_custom_call.1} parent=55 // pred_fallthru
          _
        // Predicated region
        $region61: #{tpu_custom_call.1} parent=55 // pred_check
          %p394 = pneg %p72
        $region62: #{tpu_custom_call.1} parent=55 // pred_check_branch
          %396 = sbr.rel (%p394) target = $region64
        $region63: #{tpu_custom_call.1} parent=55 // pred_region
          %397 = dma.done [#allocation7], 16
        $region64: #{tpu_custom_call.1} parent=55 // pred_fallthru
          _
        // Predicated region
        $region65: #{tpu_custom_call.1} parent=55 // pred_check
          %p398 = pneg %p93
        $region66: #{tpu_custom_call.1} parent=55 // pred_check_branch
          %400 = sbr.rel (%p398) target = $region68
        $region67: #{tpu_custom_call.1} parent=55 // pred_region
          %401 = dma.done [#allocation7], 16
        $region68: #{tpu_custom_call.1} parent=55 // pred_fallthru
          _
        // Predicated region
        $region69: #{tpu_custom_call.1} parent=55 // pred_check
          %p402 = pneg %p114
        $region70: #{tpu_custom_call.1} parent=55 // pred_check_branch
          %404 = sbr.rel (%p402) target = $region72
        $region71: #{tpu_custom_call.1} parent=55 // pred_region
          %405 = dma.done [#allocation10], 3072
        $region72: #{tpu_custom_call.1} parent=55 // pred_fallthru
          _
        // Predicated region
        $region73: #{tpu_custom_call.1} parent=55 // pred_check
          %p406 = pneg %p135
        $region74: #{tpu_custom_call.1} parent=55 // pred_check_branch
          %408 = sbr.rel (%p406) target = $region76
        $region75: #{tpu_custom_call.1} parent=55 // pred_region
          %409 = dma.done [#allocation10], 1024
        $region76: #{tpu_custom_call.1} parent=55 // pred_fallthru
          _
        // Predicated region
        $region77: #{tpu_custom_call.1} parent=55 // pred_check
          %p410 = pneg %p156
        $region78: #{tpu_custom_call.1} parent=55 // pred_check_branch
          %412 = sbr.rel (%p410) target = $region80
        $region79: #{tpu_custom_call.1} parent=55 // pred_region
          %413 = dma.done [#allocation13], 16
        $region80: #{tpu_custom_call.1} parent=55 // pred_fallthru
          _
        // Predicated region
        $region81: #{tpu_custom_call.1} parent=55 // pred_check
          %p414 = pneg %p177
        $region82: #{tpu_custom_call.1} parent=55 // pred_check_branch
          %416 = sbr.rel (%p414) target = $region84
        $region83: #{tpu_custom_call.1} parent=55 // pred_region
          %417 = dma.done [#allocation13], 16
        $region84: #{tpu_custom_call.1} parent=55 // pred_fallthru
          _
        // Predicated region
        $region85: #{tpu_custom_call.1} parent=55 // pred_check
          %p418 = pneg %p198
        $region86: #{tpu_custom_call.1} parent=55 // pred_check_branch
          %420 = sbr.rel (%p418) target = $region88
        $region87: #{tpu_custom_call.1} parent=55 // pred_region
          %421 = dma.done [#allocation16], 1024
        $region88: #{tpu_custom_call.1} parent=55 // pred_fallthru
          _
        // Predicated region
        $region89: #{tpu_custom_call.1} parent=55 // pred_check
          %p422 = pneg %p219
        $region90: #{tpu_custom_call.1} parent=55 // pred_check_branch
          %424 = sbr.rel (%p422) target = $region92
        $region91: #{tpu_custom_call.1} parent=55 // pred_region
          %425 = dma.done [#allocation16], 1024
        $region92: #{tpu_custom_call.1} parent=55 // pred_fallthru
          _
        %s426 = sand.u32 %s38, 1
        %s427 = scalar_lea.sflag [#allocation4], %s426
        %s428 = sand.u32 %s38, 1
        %s429 = smul.addr %s428, 8
        %s430 = scalar_lea.vmem [#allocation3], %s429
        %p431 = pneg %p51
        %p432 = pneg %p48
        %p433 = pneg %p72
        %p434 = pneg %p69
        %p435 = pneg %p93
        %p436 = pneg %p90
        %p437 = pneg %p114
        %p438 = pneg %p111
        %p439 = pneg %p135
        %p440 = pneg %p132
        %p441 = pneg %p156
        %p442 = pneg %p153
        %p443 = pneg %p177
        %p444 = pneg %p174
        %p445 = pneg %p198
        %p446 = pneg %p195
        %p447 = pneg %p219
        %p448 = pneg %p216
        %p449 = pneg %p245
        %p450 = pneg %p242
        %s451 = sand.u32 %s232, 1
        %s452 = scalar_lea.sflag [#allocation5], %s451
        %s453 = sand.u32 %s232, 1
        %s454 = smul.addr %s453, 8
        %s455 = scalar_lea.vmem [#allocation18], %s454
        %v457 = vld [vmem:[%s389] sm:$0xff]
        %v458 = vld [vmem:[#allocation6] sm:$0x1]
        %v459 = vld [vmem:[#allocation8] sm:$0x1]
        %460 = vadd.xlane.f32.xlu0 %v457
        %v461 = vpop.xlane.xlu0 %460
        %v462 = vrcp.pop 128.0
        %v463 = vmul.f32 %v461, %v462
        %v464 = vsub.f32 %v457, %v463
        %v465 = vmul.f32 %v464, %v464
        %466 = vadd.xlane.f32.xlu0 %v465
        %v467 = vpop.xlane.xlu0 %466
        %v468 = vmul.f32 %v467, 0.007874016
        %v469 = vrsqrt.pop %v468
        %v470 = vmul.f32 %v468, %v469
        %vm471 = vcmp.eq.f32.partialorder %v468, inf
        %v472 = vsel %vm471, %v468, %v470
        %vm473 = vcmp.eq.f32.partialorder %v468, 0.0
        %v474 = vand.u32 %v468, 2147483648
        %v475 = vsel %vm473, %v474, %v472
        %v476 = vadd.f32 %v475, 1e-06
        %v477 = vrcp.pop %v476
        %v478 = vmul.f32 %v464, %v477
        %v480 = vlaneseq
        %v481 = vshrl.u32 %v480, 7
        %v482 = vsub.s32 0, %v481
        %v483 = vrot.slane %v458, %v482
        %v485 = vmul.f32 %v483, %v478
        %v487 = vlaneseq
        %v488 = vshrl.u32 %v487, 7
        %v489 = vsub.s32 0, %v488
        %v490 = vrot.slane %v459, %v489
        %v492 = vadd.f32 %v485, %v490
        %v493 = vpack.c.bf16 %v492, %v492
        %v494 = vld [vmem:[#allocation9] sm:$0xff]
        %v495 = vld [vmem:[#allocation9 + $0x8] sm:$0xf]
        %v496 = vld [vmem:[#allocation9 + $0xc] sm:$0xff]
        %v497 = vld [vmem:[#allocation9 + $0x14] sm:$0xf]
        %v498 = vld [vmem:[#allocation9 + $0x18] sm:$0xff]
        %v499 = vld [vmem:[#allocation9 + $0x20] sm:$0xf]
        %v500 = vld [vmem:[#allocation9 + $0x24] sm:$0xff]
        %v501 = vld [vmem:[#allocation9 + $0x2c] sm:$0xf]
        %v502 = vld [vmem:[#allocation9 + $0x30] sm:$0xff]
        %v503 = vld [vmem:[#allocation9 + $0x38] sm:$0xf]
        %v504 = vld [vmem:[#allocation9 + $0x3c] sm:$0xff]
        %v505 = vld [vmem:[#allocation9 + $0x44] sm:$0xf]
        %v506 = vld [vmem:[#allocation9 + $0x48] sm:$0xff]
        %v507 = vld [vmem:[#allocation9 + $0x50] sm:$0xf]
        %v508 = vld [vmem:[#allocation9 + $0x54] sm:$0xff]
        %v509 = vld [vmem:[#allocation9 + $0x5c] sm:$0xf]
        %v510 = vld [vmem:[#allocation9 + $0x60] sm:$0xff]
        %v511 = vld [vmem:[#allocation9 + $0x68] sm:$0xf]
        %v512 = vld [vmem:[#allocation9 + $0x6c] sm:$0xff]
        %v513 = vld [vmem:[#allocation9 + $0x74] sm:$0xf]
        %v514 = vld [vmem:[#allocation9 + $0x78] sm:$0xff]
        %v515 = vld [vmem:[#allocation9 + $0x80] sm:$0xf]
        %v516 = vld [vmem:[#allocation9 + $0x84] sm:$0xff]
        %v517 = vld [vmem:[#allocation9 + $0x8c] sm:$0xf]
        %v518 = vld [vmem:[#allocation9 + $0x90] sm:$0xff]
        %v519 = vld [vmem:[#allocation9 + $0x98] sm:$0xf]
        %v520 = vld [vmem:[#allocation9 + $0x9c] sm:$0xff]
        %v521 = vld [vmem:[#allocation9 + $0xa4] sm:$0xf]
        %v522 = vld [vmem:[#allocation9 + $0xa8] sm:$0xff]
        %v523 = vld [vmem:[#allocation9 + $0xb0] sm:$0xf]
        %v524 = vld [vmem:[#allocation9 + $0xb4] sm:$0xff]
        %v525 = vld [vmem:[#allocation9 + $0xbc] sm:$0xf]
        %v558 = vunpack.c.l.b16 %v494
        %v559 = vunpack.c.h.b16 %v494
        %v560 = vunpack.c.l.b16 %v495
        %v561 = vunpack.c.l.b16 %v496
        %v562 = vunpack.c.h.b16 %v496
        %v563 = vunpack.c.l.b16 %v497
        %v564 = vunpack.c.l.b16 %v498
        %v565 = vunpack.c.h.b16 %v498
        %v566 = vunpack.c.l.b16 %v499
        %v567 = vunpack.c.l.b16 %v500
        %v568 = vunpack.c.h.b16 %v500
        %v569 = vunpack.c.l.b16 %v501
        %v570 = vunpack.c.l.b16 %v502
        %v571 = vunpack.c.h.b16 %v502
        %v572 = vunpack.c.l.b16 %v503
        %v573 = vunpack.c.l.b16 %v504
        %v574 = vunpack.c.h.b16 %v504
        %v575 = vunpack.c.l.b16 %v505
        %v576 = vunpack.c.l.b16 %v506
        %v577 = vunpack.c.h.b16 %v506
        %v578 = vunpack.c.l.b16 %v507
        %v579 = vunpack.c.l.b16 %v508
        %v580 = vunpack.c.h.b16 %v508
        %v581 = vunpack.c.l.b16 %v509
        %v582 = vunpack.c.l.b16 %v510
        %v583 = vunpack.c.h.b16 %v510
        %v584 = vunpack.c.l.b16 %v511
        %v585 = vunpack.c.l.b16 %v512
        %v586 = vunpack.c.h.b16 %v512
        %v587 = vunpack.c.l.b16 %v513
        %v588 = vunpack.c.l.b16 %v514
        %v589 = vunpack.c.h.b16 %v514
        %v590 = vunpack.c.l.b16 %v515
        %v591 = vunpack.c.l.b16 %v516
        %v592 = vunpack.c.h.b16 %v516
        %v593 = vunpack.c.l.b16 %v517
        %v594 = vunpack.c.l.b16 %v518
        %v595 = vunpack.c.h.b16 %v518
        %v596 = vunpack.c.l.b16 %v519
        %v597 = vunpack.c.l.b16 %v520
        %v598 = vunpack.c.h.b16 %v520
        %v599 = vunpack.c.l.b16 %v521
        %v600 = vunpack.c.l.b16 %v522
        %v601 = vunpack.c.h.b16 %v522
        %v602 = vunpack.c.l.b16 %v523
        %v603 = vunpack.c.l.b16 %v524
        %v604 = vunpack.c.h.b16 %v524
        %v605 = vunpack.c.l.b16 %v525
        %v606 = vpack.c.b16 %v561, %v558
        %v607 = vpack.c.b16 %v562, %v559
        %v608 = vpack.c.b16 %v563, %v560
        %v609 = vpack.c.b16 %v567, %v564
        %v610 = vpack.c.b16 %v568, %v565
        %v611 = vpack.c.b16 %v569, %v566
        %v612 = vpack.c.b16 %v573, %v570
        %v613 = vpack.c.b16 %v574, %v571
        %v614 = vpack.c.b16 %v575, %v572
        %v615 = vpack.c.b16 %v579, %v576
        %v616 = vpack.c.b16 %v580, %v577
        %v617 = vpack.c.b16 %v581, %v578
        %v618 = vpack.c.b16 %v585, %v582
        %v619 = vpack.c.b16 %v586, %v583
        %v620 = vpack.c.b16 %v587, %v584
        %v621 = vpack.c.b16 %v591, %v588
        %v622 = vpack.c.b16 %v592, %v589
        %v623 = vpack.c.b16 %v593, %v590
        %v624 = vpack.c.b16 %v597, %v594
        %v625 = vpack.c.b16 %v598, %v595
        %v626 = vpack.c.b16 %v599, %v596
        %v627 = vpack.c.b16 %v603, %v600
        %v628 = vpack.c.b16 %v604, %v601
        %v629 = vpack.c.b16 %v605, %v602
        %654 = vmatprep.subr.bf16.mxu0 %v607
        %655 = vmatpush1.bf16.msra.mxu0 %v606
        %656 = vmatprep.subr.bf16.mxu0 %v610
        %657 = vmatpush1.bf16.msra.mxu0 %v609
        %658 = vmatprep.subr.bf16.mxu0 %v613
        %659 = vmatpush1.bf16.msra.mxu0 %v612
        %660 = vmatprep.subr.bf16.mxu0 %v616
        %661 = vmatpush1.bf16.msra.mxu0 %v615
        %662 = vmatprep.subr.bf16.mxu0 %v619
        %663 = vmatpush1.bf16.msra.mxu0 %v618
        %664 = vmatprep.subr.bf16.mxu0 %v622
        %665 = vmatpush1.bf16.msra.mxu0 %v621
        %666 = vmatprep.subr.bf16.mxu0 %v625
        %667 = vmatpush1.bf16.msra.mxu0 %v624
        %668 = vmatprep.subr.bf16.mxu0 %v628
        %669 = vmatpush1.bf16.msra.mxu0 %v627
        %670 = vmatprep.subr.bf16.mxu0 0
        %671 = vmatpush1.bf16.msra.mxu0 0
        %672 = vmatprep.subr.bf16.mxu0 0
        %673 = vmatpush1.bf16.msra.mxu0 0
        %674 = vmatprep.subr.bf16.mxu0 0
        %675 = vmatpush1.bf16.msra.mxu0 0
        %676 = vmatprep.subr.bf16.mxu0 0
        %677 = vmatpush1.bf16.msra.mxu0 0
        %678 = vmatprep.subr.bf16.mxu0 0
        %679 = vmatpush1.bf16.msra.mxu0 0
        %680 = vmatprep.subr.bf16.mxu0 0
        %681 = vmatpush1.bf16.msra.mxu0 0
        %682 = vmatprep.subr.bf16.mxu0 0
        %683 = vmatpush1.bf16.msra.mxu0 0
        %684 = vmatprep.subr.bf16.mxu0 0
        %685 = vmatpush1.bf16.msra.mxu0 0
        %686 = vmatprep.mubr.bf16.mxu0 0
        %687 = vmatmul.mubr.bf16.gmra.mrb[0].mxu0 %v493
        %v688 = vpop.f32.mrb[0].mxu0
        %v689 = vadd.f32 0.0, %v688
        %v690 = vpop.f32.mrb[0].mxu0
        %v691 = vadd.f32 0.0, %v690
        %v692 = vpop.f32.mrb[0].mxu0
        %v693 = vpop.f32.mrb[0].mxu0
        %694 = vdwg.mxu0
        %695 = vmatprep.subr.bf16.mxu0 0
        %696 = vmatpush1.bf16.msra.mxu0 %v608
        %697 = vmatprep.subr.bf16.mxu0 0
        %698 = vmatpush1.bf16.msra.mxu0 %v611
        %699 = vmatprep.subr.bf16.mxu0 0
        %700 = vmatpush1.bf16.msra.mxu0 %v614
        %701 = vmatprep.subr.bf16.mxu0 0
        %702 = vmatpush1.bf16.msra.mxu0 %v617
        %703 = vmatprep.subr.bf16.mxu0 0
        %704 = vmatpush1.bf16.msra.mxu0 %v620
        %705 = vmatprep.subr.bf16.mxu0 0
        %706 = vmatpush1.bf16.msra.mxu0 %v623
        %707 = vmatprep.subr.bf16.mxu0 0
        %708 = vmatpush1.bf16.msra.mxu0 %v626
        %709 = vmatprep.subr.bf16.mxu0 0
        %710 = vmatpush1.bf16.msra.mxu0 %v629
        %711 = vmatprep.subr.bf16.mxu0 0
        %712 = vmatpush1.bf16.msra.mxu0 0
        %713 = vmatprep.subr.bf16.mxu0 0
        %714 = vmatpush1.bf16.msra.mxu0 0
        %715 = vmatprep.subr.bf16.mxu0 0
        %716 = vmatpush1.bf16.msra.mxu0 0
        %717 = vmatprep.subr.bf16.mxu0 0
        %718 = vmatpush1.bf16.msra.mxu0 0
        %719 = vmatprep.subr.bf16.mxu0 0
        %720 = vmatpush1.bf16.msra.mxu0 0
        %721 = vmatprep.subr.bf16.mxu0 0
        %722 = vmatpush1.bf16.msra.mxu0 0
        %723 = vmatprep.subr.bf16.mxu0 0
        %724 = vmatpush1.bf16.msra.mxu0 0
        %725 = vmatprep.subr.bf16.mxu0 0
        %726 = vmatpush1.bf16.msra.mxu0 0
        %727 = vmatprep.mubr.bf16.mxu0 0
        %728 = vmatmul.mubr.bf16.gmra.mrb[0].mxu0 %v493
        %v729 = vpop.f32.mrb[0].mxu0
        %v730 = vadd.f32 0.0, %v729
        %v731 = vpop.f32.mrb[0].mxu0
        %v732 = vpop.f32.mrb[0].mxu0
        %v733 = vpop.f32.mrb[0].mxu0
        %734 = vdwg.mxu0
        %v735 = vpack.c.bf16 %v689, %v689
        %v736 = vpack.c.bf16 %v691, %v691
        %v737 = vpack.c.bf16 %v730, %v730
        %vm738 = vcmask 261120
        %v740 = vsel %vm738, %v735, 0
        %v743 = vsel %vm738, %v736, 0
        %745 = vmatprep.subr.bf16.mxu0 0
        %746 = vmatpush1.bf16.xpose.msra.mxu0 %v743
        %747 = vmatprep.subr.bf16.mxu0 0
        %748 = vmatpush1.bf16.xpose.msra.mxu0 0
        %749 = vmatprep.subr.bf16.mxu0 0
        %750 = vmatpush1.bf16.xpose.msra.mxu0 0
        %751 = vmatprep.subr.bf16.mxu0 0
        %752 = vmatpush1.bf16.xpose.msra.mxu0 0
        %753 = vmatprep.subr.bf16.mxu0 0
        %754 = vmatpush1.bf16.xpose.msra.mxu0 0
        %755 = vmatprep.subr.bf16.mxu0 0
        %756 = vmatpush1.bf16.xpose.msra.mxu0 0
        %757 = vmatprep.subr.bf16.mxu0 0
        %758 = vmatpush1.bf16.xpose.msra.mxu0 0
        %759 = vmatprep.subr.bf16.mxu0 0
        %760 = vmatpush1.bf16.xpose.msra.mxu0 0
        %761 = vmatprep.subr.bf16.mxu0 0
        %762 = vmatpush1.bf16.xpose.msra.mxu0 0
        %763 = vmatprep.subr.bf16.mxu0 0
        %764 = vmatpush1.bf16.xpose.msra.mxu0 0
        %765 = vmatprep.subr.bf16.mxu0 0
        %766 = vmatpush1.bf16.xpose.msra.mxu0 0
        %767 = vmatprep.subr.bf16.mxu0 0
        %768 = vmatpush1.bf16.xpose.msra.mxu0 0
        %769 = vmatprep.subr.bf16.mxu0 0
        %770 = vmatpush1.bf16.xpose.msra.mxu0 0
        %771 = vmatprep.subr.bf16.mxu0 0
        %772 = vmatpush1.bf16.xpose.msra.mxu0 0
        %773 = vmatprep.subr.bf16.mxu0 0
        %774 = vmatpush1.bf16.xpose.msra.mxu0 0
        %775 = vmatprep.subr.bf16.mxu0 0
        %776 = vmatpush1.bf16.xpose.msra.mxu0 0
        %777 = vmatprep.mubr.bf16.mxu0 0
        %778 = vmatmul.mubr.bf16.gmra.mrb[0].mxu0 %v740
        %v779 = vpop.f32.mrb[0].mxu0
        %v780 = vadd.f32 0.0, %v779
        %v781 = vpop.f32.mrb[0].mxu0
        %v782 = vpop.f32.mrb[0].mxu0
        %v783 = vpop.f32.mrb[0].mxu0
        %784 = vdwg.mxu0
        %vm785 = vcmask 64512
        %v786 = vsel %vm785, %v780, -inf
        %787 = vmax.xlane.f32.xlu0 %v786
        %v788 = vpop.xlane.xlu0 %787
        %v789 = vsub.f32 %v780, %v788
        %v790 = vmul.f32 %v789, 1.442695
        %v791 = vpow.pop %v790
        %v792 = vsel %vm785, %v791, 0.0
        %793 = vadd.xlane.f32.xlu0 %v792
        %v794 = vpop.xlane.xlu0 %793
        %v795 = vrcp.pop %v794
        %v796 = vmul.f32 %v791, %v795
        %v797 = vpack.c.bf16 %v796, %v796
        %v799 = vsel %vm785, %v797, 0
        %vm801 = vcmask 1043456
        %v803 = vsel %vm801, %v737, 0
        %805 = vmatprep.subr.bf16.mxu0 0
        %806 = vmatpush1.bf16.msra.mxu0 %v803
        %807 = vmatprep.subr.bf16.mxu0 0
        %808 = vmatpush1.bf16.msra.mxu0 0
        %809 = vmatprep.subr.bf16.mxu0 0
        %810 = vmatpush1.bf16.msra.mxu0 0
        %811 = vmatprep.subr.bf16.mxu0 0
        %812 = vmatpush1.bf16.msra.mxu0 0
        %813 = vmatprep.subr.bf16.mxu0 0
        %814 = vmatpush1.bf16.msra.mxu0 0
        %815 = vmatprep.subr.bf16.mxu0 0
        %816 = vmatpush1.bf16.msra.mxu0 0
        %817 = vmatprep.subr.bf16.mxu0 0
        %818 = vmatpush1.bf16.msra.mxu0 0
        %819 = vmatprep.subr.bf16.mxu0 0
        %820 = vmatpush1.bf16.msra.mxu0 0
        %821 = vmatprep.subr.bf16.mxu0 0
        %822 = vmatpush1.bf16.msra.mxu0 0
        %823 = vmatprep.subr.bf16.mxu0 0
        %824 = vmatpush1.bf16.msra.mxu0 0
        %825 = vmatprep.subr.bf16.mxu0 0
        %826 = vmatpush1.bf16.msra.mxu0 0
        %827 = vmatprep.subr.bf16.mxu0 0
        %828 = vmatpush1.bf16.msra.mxu0 0
        %829 = vmatprep.subr.bf16.mxu0 0
        %830 = vmatpush1.bf16.msra.mxu0 0
        %831 = vmatprep.subr.bf16.mxu0 0
        %832 = vmatpush1.bf16.msra.mxu0 0
        %833 = vmatprep.subr.bf16.mxu0 0
        %834 = vmatpush1.bf16.msra.mxu0 0
        %835 = vmatprep.subr.bf16.mxu0 0
        %836 = vmatpush1.bf16.msra.mxu0 0
        %837 = vmatprep.mubr.bf16.mxu0 0
        %838 = vmatmul.mubr.bf16.gmra.mrb[0].mxu0 %v799
        %v839 = vpop.f32.mrb[0].mxu0
        %v840 = vadd.f32 0.0, %v839
        %v841 = vpop.f32.mrb[0].mxu0
        %v842 = vpop.f32.mrb[0].mxu0
        %v843 = vpop.f32.mrb[0].mxu0
        %844 = vdwg.mxu0
        %v845 = vpack.c.bf16 %v840, %v840
        %vm846 = vcmask 257024
        %847 = vst.msk [vmem:[#allocation2] sm:$0xf] %vm846, %v845
        %849 = vrot.lane.b32.xlu0 %v735, 96
        %v850 = vpop.permute.xlu0 %849
        %852 = vrot.lane.b32.xlu0 %v736, 96
        %v853 = vpop.permute.xlu0 %852
        %v855 = vsel %vm738, %v850, 0
        %v858 = vsel %vm738, %v853, 0
        %860 = vmatprep.subr.bf16.mxu0 0
        %861 = vmatpush1.bf16.xpose.msra.mxu0 %v858
        %862 = vmatprep.subr.bf16.mxu0 0
        %863 = vmatpush1.bf16.xpose.msra.mxu0 0
        %864 = vmatprep.subr.bf16.mxu0 0
        %865 = vmatpush1.bf16.xpose.msra.mxu0 0
        %866 = vmatprep.subr.bf16.mxu0 0
        %867 = vmatpush1.bf16.xpose.msra.mxu0 0
        %868 = vmatprep.subr.bf16.mxu0 0
        %869 = vmatpush1.bf16.xpose.msra.mxu0 0
        %870 = vmatprep.subr.bf16.mxu0 0
        %871 = vmatpush1.bf16.xpose.msra.mxu0 0
        %872 = vmatprep.subr.bf16.mxu0 0
        %873 = vmatpush1.bf16.xpose.msra.mxu0 0
        %874 = vmatprep.subr.bf16.mxu0 0
        %875 = vmatpush1.bf16.xpose.msra.mxu0 0
        %876 = vmatprep.subr.bf16.mxu0 0
        %877 = vmatpush1.bf16.xpose.msra.mxu0 0
        %878 = vmatprep.subr.bf16.mxu0 0
        %879 = vmatpush1.bf16.xpose.msra.mxu0 0
        %880 = vmatprep.subr.bf16.mxu0 0
        %881 = vmatpush1.bf16.xpose.msra.mxu0 0
        %882 = vmatprep.subr.bf16.mxu0 0
        %883 = vmatpush1.bf16.xpose.msra.mxu0 0
        %884 = vmatprep.subr.bf16.mxu0 0
        %885 = vmatpush1.bf16.xpose.msra.mxu0 0
        %886 = vmatprep.subr.bf16.mxu0 0
        %887 = vmatpush1.bf16.xpose.msra.mxu0 0
        %888 = vmatprep.subr.bf16.mxu0 0
        %889 = vmatpush1.bf16.xpose.msra.mxu0 0
        %890 = vmatprep.subr.bf16.mxu0 0
        %891 = vmatpush1.bf16.xpose.msra.mxu0 0
        %892 = vmatprep.mubr.bf16.mxu0 0
        %893 = vmatmul.mubr.bf16.gmra.mrb[0].mxu0 %v855
        %v894 = vpop.f32.mrb[0].mxu0
        %v895 = vadd.f32 0.0, %v894
        %v896 = vpop.f32.mrb[0].mxu0
        %v897 = vpop.f32.mrb[0].mxu0
        %v898 = vpop.f32.mrb[0].mxu0
        %899 = vdwg.mxu0
        %v900 = vsel %vm785, %v895, -inf
        %901 = vmax.xlane.f32.xlu0 %v900
        %v902 = vpop.xlane.xlu0 %901
        %v903 = vsub.f32 %v895, %v902
        %v904 = vmul.f32 %v903, 1.442695
        %v905 = vpow.pop %v904
        %v906 = vsel %vm785, %v905, 0.0
        %907 = vadd.xlane.f32.xlu0 %v906
        %v908 = vpop.xlane.xlu0 %907
        %v909 = vrcp.pop %v908
        %v910 = vmul.f32 %v905, %v909
        %v911 = vpack.c.bf16 %v910, %v910
        %913 = vrot.lane.b32.xlu0 %v737, 96
        %v914 = vpop.permute.xlu0 %913
        %v916 = vsel %vm785, %v911, 0
        %v919 = vsel %vm801, %v914, 0
        %921 = vmatprep.subr.bf16.mxu0 0
        %922 = vmatpush1.bf16.msra.mxu0 %v919
        %923 = vmatprep.subr.bf16.mxu0 0
        %924 = vmatpush1.bf16.msra.mxu0 0
        %925 = vmatprep.subr.bf16.mxu0 0
        %926 = vmatpush1.bf16.msra.mxu0 0
        %927 = vmatprep.subr.bf16.mxu0 0
        %928 = vmatpush1.bf16.msra.mxu0 0
        %929 = vmatprep.subr.bf16.mxu0 0
        %930 = vmatpush1.bf16.msra.mxu0 0
        %931 = vmatprep.subr.bf16.mxu0 0
        %932 = vmatpush1.bf16.msra.mxu0 0
        %933 = vmatprep.subr.bf16.mxu0 0
        %934 = vmatpush1.bf16.msra.mxu0 0
        %935 = vmatprep.subr.bf16.mxu0 0
        %936 = vmatpush1.bf16.msra.mxu0 0
        %937 = vmatprep.subr.bf16.mxu0 0
        %938 = vmatpush1.bf16.msra.mxu0 0
        %939 = vmatprep.subr.bf16.mxu0 0
        %940 = vmatpush1.bf16.msra.mxu0 0
        %941 = vmatprep.subr.bf16.mxu0 0
        %942 = vmatpush1.bf16.msra.mxu0 0
        %943 = vmatprep.subr.bf16.mxu0 0
        %944 = vmatpush1.bf16.msra.mxu0 0
        %945 = vmatprep.subr.bf16.mxu0 0
        %946 = vmatpush1.bf16.msra.mxu0 0
        %947 = vmatprep.subr.bf16.mxu0 0
        %948 = vmatpush1.bf16.msra.mxu0 0
        %949 = vmatprep.subr.bf16.mxu0 0
        %950 = vmatpush1.bf16.msra.mxu0 0
        %951 = vmatprep.subr.bf16.mxu0 0
        %952 = vmatpush1.bf16.msra.mxu0 0
        %953 = vmatprep.mubr.bf16.mxu0 0
        %954 = vmatmul.mubr.bf16.gmra.mrb[0].mxu0 %v916
        %v955 = vpop.f32.mrb[0].mxu0
        %v956 = vadd.f32 0.0, %v955
        %v957 = vpop.f32.mrb[0].mxu0
        %v958 = vpop.f32.mrb[0].mxu0
        %v959 = vpop.f32.mrb[0].mxu0
        %960 = vdwg.mxu0
        %v961 = vpack.c.bf16 %v956, %v956
        %v963 = vunpack.c.l.b16 %v961
        %v964 = vpack.c.b16 %v963, %v963
        %965 = vrot.lane.b32.xlu0 %v964, 32
        %v966 = vpop.permute.xlu0 %965
        %vm968 = vcmask 519424
        %969 = vst.msk [vmem:[#allocation2] sm:$0xf] %vm968, %v966
        %970 = vrot.lane.b32.xlu0 %v735, 64
        %v971 = vpop.permute.xlu0 %970
        %972 = vrot.lane.b32.xlu0 %v736, 64
        %v973 = vpop.permute.xlu0 %972
        %v975 = vsel %vm738, %v971, 0
        %v978 = vsel %vm738, %v973, 0
        %980 = vmatprep.subr.bf16.mxu0 0
        %981 = vmatpush1.bf16.xpose.msra.mxu0 %v978
        %982 = vmatprep.subr.bf16.mxu0 0
        %983 = vmatpush1.bf16.xpose.msra.mxu0 0
        %984 = vmatprep.subr.bf16.mxu0 0
        %985 = vmatpush1.bf16.xpose.msra.mxu0 0
        %986 = vmatprep.subr.bf16.mxu0 0
        %987 = vmatpush1.bf16.xpose.msra.mxu0 0
        %988 = vmatprep.subr.bf16.mxu0 0
        %989 = vmatpush1.bf16.xpose.msra.mxu0 0
        %990 = vmatprep.subr.bf16.mxu0 0
        %991 = vmatpush1.bf16.xpose.msra.mxu0 0
        %992 = vmatprep.subr.bf16.mxu0 0
        %993 = vmatpush1.bf16.xpose.msra.mxu0 0
        %994 = vmatprep.subr.bf16.mxu0 0
        %995 = vmatpush1.bf16.xpose.msra.mxu0 0
        %996 = vmatprep.subr.bf16.mxu0 0
        %997 = vmatpush1.bf16.xpose.msra.mxu0 0
        %998 = vmatprep.subr.bf16.mxu0 0
        %999 = vmatpush1.bf16.xpose.msra.mxu0 0
        %1000 = vmatprep.subr.bf16.mxu0 0
        %1001 = vmatpush1.bf16.xpose.msra.mxu0 0
        %1002 = vmatprep.subr.bf16.mxu0 0
        %1003 = vmatpush1.bf16.xpose.msra.mxu0 0
        %1004 = vmatprep.subr.bf16.mxu0 0
        %1005 = vmatpush1.bf16.xpose.msra.mxu0 0
        %1006 = vmatprep.subr.bf16.mxu0 0
        %1007 = vmatpush1.bf16.xpose.msra.mxu0 0
        %1008 = vmatprep.subr.bf16.mxu0 0
        %1009 = vmatpush1.bf16.xpose.msra.mxu0 0
        %1010 = vmatprep.subr.bf16.mxu0 0
        %1011 = vmatpush1.bf16.xpose.msra.mxu0 0
        %1012 = vmatprep.mubr.bf16.mxu0 0
        %1013 = vmatmul.mubr.bf16.gmra.mrb[0].mxu0 %v975
        %v1014 = vpop.f32.mrb[0].mxu0
        %v1015 = vadd.f32 0.0, %v1014
        %v1016 = vpop.f32.mrb[0].mxu0
        %v1017 = vpop.f32.mrb[0].mxu0
        %v1018 = vpop.f32.mrb[0].mxu0
        %1019 = vdwg.mxu0
        %v1020 = vsel %vm785, %v1015, -inf
        %1021 = vmax.xlane.f32.xlu0 %v1020
        %v1022 = vpop.xlane.xlu0 %1021
        %v1023 = vsub.f32 %v1015, %v1022
        %v1024 = vmul.f32 %v1023, 1.442695
        %v1025 = vpow.pop %v1024
        %v1026 = vsel %vm785, %v1025, 0.0
        %1027 = vadd.xlane.f32.xlu0 %v1026
        %v1028 = vpop.xlane.xlu0 %1027
        %v1029 = vrcp.pop %v1028
        %v1030 = vmul.f32 %v1025, %v1029
        %v1031 = vpack.c.bf16 %v1030, %v1030
        %1032 = vrot.lane.b32.xlu0 %v737, 64
        %v1033 = vpop.permute.xlu0 %1032
        %v1035 = vsel %vm785, %v1031, 0
        %v1038 = vsel %vm801, %v1033, 0
        %1040 = vmatprep.subr.bf16.mxu0 0
        %1041 = vmatpush1.bf16.msra.mxu0 %v1038
        %1042 = vmatprep.subr.bf16.mxu0 0
        %1043 = vmatpush1.bf16.msra.mxu0 0
        %1044 = vmatprep.subr.bf16.mxu0 0
        %1045 = vmatpush1.bf16.msra.mxu0 0
        %1046 = vmatprep.subr.bf16.mxu0 0
        %1047 = vmatpush1.bf16.msra.mxu0 0
        %1048 = vmatprep.subr.bf16.mxu0 0
        %1049 = vmatpush1.bf16.msra.mxu0 0
        %1050 = vmatprep.subr.bf16.mxu0 0
        %1051 = vmatpush1.bf16.msra.mxu0 0
        %1052 = vmatprep.subr.bf16.mxu0 0
        %1053 = vmatpush1.bf16.msra.mxu0 0
        %1054 = vmatprep.subr.bf16.mxu0 0
        %1055 = vmatpush1.bf16.msra.mxu0 0
        %1056 = vmatprep.subr.bf16.mxu0 0
        %1057 = vmatpush1.bf16.msra.mxu0 0
        %1058 = vmatprep.subr.bf16.mxu0 0
        %1059 = vmatpush1.bf16.msra.mxu0 0
        %1060 = vmatprep.subr.bf16.mxu0 0
        %1061 = vmatpush1.bf16.msra.mxu0 0
        %1062 = vmatprep.subr.bf16.mxu0 0
        %1063 = vmatpush1.bf16.msra.mxu0 0
        %1064 = vmatprep.subr.bf16.mxu0 0
        %1065 = vmatpush1.bf16.msra.mxu0 0
        %1066 = vmatprep.subr.bf16.mxu0 0
        %1067 = vmatpush1.bf16.msra.mxu0 0
        %1068 = vmatprep.subr.bf16.mxu0 0
        %1069 = vmatpush1.bf16.msra.mxu0 0
        %1070 = vmatprep.subr.bf16.mxu0 0
        %1071 = vmatpush1.bf16.msra.mxu0 0
        %1072 = vmatprep.mubr.bf16.mxu0 0
        %1073 = vmatmul.mubr.bf16.gmra.mrb[0].mxu0 %v1035
        %v1074 = vpop.f32.mrb[0].mxu0
        %v1075 = vadd.f32 0.0, %v1074
        %v1076 = vpop.f32.mrb[0].mxu0
        %v1077 = vpop.f32.mrb[0].mxu0
        %v1078 = vpop.f32.mrb[0].mxu0
        %1079 = vdwg.mxu0
        %v1080 = vpack.c.bf16 %v1075, %v1075
        %v1082 = vunpack.c.l.b16 %v1080
        %v1083 = vpack.c.b16 %v1082, %v1082
        %1084 = vrot.lane.b32.xlu0 %v1083, 64
        %v1085 = vpop.permute.xlu0 %1084
        %vm1087 = vcmask 781824
        %1088 = vst.msk [vmem:[#allocation2] sm:$0xf] %vm1087, %v1085
        %1089 = vrot.lane.b32.xlu0 %v735, 32
        %v1090 = vpop.permute.xlu0 %1089
        %1091 = vrot.lane.b32.xlu0 %v736, 32
        %v1092 = vpop.permute.xlu0 %1091
        %v1094 = vsel %vm738, %v1090, 0
        %v1097 = vsel %vm738, %v1092, 0
        %1099 = vmatprep.subr.bf16.mxu0 0
        %1100 = vmatpush1.bf16.xpose.msra.mxu0 %v1097
        %1101 = vmatprep.subr.bf16.mxu0 0
        %1102 = vmatpush1.bf16.xpose.msra.mxu0 0
        %1103 = vmatprep.subr.bf16.mxu0 0
        %1104 = vmatpush1.bf16.xpose.msra.mxu0 0
        %1105 = vmatprep.subr.bf16.mxu0 0
        %1106 = vmatpush1.bf16.xpose.msra.mxu0 0
        %1107 = vmatprep.subr.bf16.mxu0 0
        %1108 = vmatpush1.bf16.xpose.msra.mxu0 0
        %1109 = vmatprep.subr.bf16.mxu0 0
        %1110 = vmatpush1.bf16.xpose.msra.mxu0 0
        %1111 = vmatprep.subr.bf16.mxu0 0
        %1112 = vmatpush1.bf16.xpose.msra.mxu0 0
        %1113 = vmatprep.subr.bf16.mxu0 0
        %1114 = vmatpush1.bf16.xpose.msra.mxu0 0
        %1115 = vmatprep.subr.bf16.mxu0 0
        %1116 = vmatpush1.bf16.xpose.msra.mxu0 0
        %1117 = vmatprep.subr.bf16.mxu0 0
        %1118 = vmatpush1.bf16.xpose.msra.mxu0 0
        %1119 = vmatprep.subr.bf16.mxu0 0
        %1120 = vmatpush1.bf16.xpose.msra.mxu0 0
        %1121 = vmatprep.subr.bf16.mxu0 0
        %1122 = vmatpush1.bf16.xpose.msra.mxu0 0
        %1123 = vmatprep.subr.bf16.mxu0 0
        %1124 = vmatpush1.bf16.xpose.msra.mxu0 0
        %1125 = vmatprep.subr.bf16.mxu0 0
        %1126 = vmatpush1.bf16.xpose.msra.mxu0 0
        %1127 = vmatprep.subr.bf16.mxu0 0
        %1128 = vmatpush1.bf16.xpose.msra.mxu0 0
        %1129 = vmatprep.subr.bf16.mxu0 0
        %1130 = vmatpush1.bf16.xpose.msra.mxu0 0
        %1131 = vmatprep.mubr.bf16.mxu0 0
        %1132 = vmatmul.mubr.bf16.gmra.mrb[0].mxu0 %v1094
        %v1133 = vpop.f32.mrb[0].mxu0
        %v1134 = vadd.f32 0.0, %v1133
        %v1135 = vpop.f32.mrb[0].mxu0
        %v1136 = vpop.f32.mrb[0].mxu0
        %v1137 = vpop.f32.mrb[0].mxu0
        %1138 = vdwg.mxu0
        %v1139 = vsel %vm785, %v1134, -inf
        %1140 = vmax.xlane.f32.xlu0 %v1139
        %v1141 = vpop.xlane.xlu0 %1140
        %v1142 = vsub.f32 %v1134, %v1141
        %v1143 = vmul.f32 %v1142, 1.442695
        %v1144 = vpow.pop %v1143
        %v1145 = vsel %vm785, %v1144, 0.0
        %1146 = vadd.xlane.f32.xlu0 %v1145
        %v1147 = vpop.xlane.xlu0 %1146
        %v1148 = vrcp.pop %v1147
        %v1149 = vmul.f32 %v1144, %v1148
        %v1150 = vpack.c.bf16 %v1149, %v1149
        %1151 = vrot.lane.b32.xlu0 %v737, 32
        %v1152 = vpop.permute.xlu0 %1151
        %v1154 = vsel %vm785, %v1150, 0
        %v1157 = vsel %vm801, %v1152, 0
        %1159 = vmatprep.subr.bf16.mxu0 0
        %1160 = vmatpush1.bf16.msra.mxu0 %v1157
        %1161 = vmatprep.subr.bf16.mxu0 0
        %1162 = vmatpush1.bf16.msra.mxu0 0
        %1163 = vmatprep.subr.bf16.mxu0 0
        %1164 = vmatpush1.bf16.msra.mxu0 0
        %1165 = vmatprep.subr.bf16.mxu0 0
        %1166 = vmatpush1.bf16.msra.mxu0 0
        %1167 = vmatprep.subr.bf16.mxu0 0
        %1168 = vmatpush1.bf16.msra.mxu0 0
        %1169 = vmatprep.subr.bf16.mxu0 0
        %1170 = vmatpush1.bf16.msra.mxu0 0
        %1171 = vmatprep.subr.bf16.mxu0 0
        %1172 = vmatpush1.bf16.msra.mxu0 0
        %1173 = vmatprep.subr.bf16.mxu0 0
        %1174 = vmatpush1.bf16.msra.mxu0 0
        %1175 = vmatprep.subr.bf16.mxu0 0
        %1176 = vmatpush1.bf16.msra.mxu0 0
        %1177 = vmatprep.subr.bf16.mxu0 0
        %1178 = vmatpush1.bf16.msra.mxu0 0
        %1179 = vmatprep.subr.bf16.mxu0 0
        %1180 = vmatpush1.bf16.msra.mxu0 0
        %1181 = vmatprep.subr.bf16.mxu0 0
        %1182 = vmatpush1.bf16.msra.mxu0 0
        %1183 = vmatprep.subr.bf16.mxu0 0
        %1184 = vmatpush1.bf16.msra.mxu0 0
        %1185 = vmatprep.subr.bf16.mxu0 0
        %1186 = vmatpush1.bf16.msra.mxu0 0
        %1187 = vmatprep.subr.bf16.mxu0 0
        %1188 = vmatpush1.bf16.msra.mxu0 0
        %1189 = vmatprep.subr.bf16.mxu0 0
        %1190 = vmatpush1.bf16.msra.mxu0 0
        %1191 = vmatprep.mubr.bf16.mxu0 0
        %1192 = vmatmul.mubr.bf16.gmra.mrb[0].mxu0 %v1154
        %v1193 = vpop.f32.mrb[0].mxu0
        %v1194 = vadd.f32 0.0, %v1193
        %v1195 = vpop.f32.mrb[0].mxu0
        %v1196 = vpop.f32.mrb[0].mxu0
        %v1197 = vpop.f32.mrb[0].mxu0
        %1198 = vdwg.mxu0
        %v1199 = vpack.c.bf16 %v1194, %v1194
        %v1201 = vunpack.c.l.b16 %v1199
        %v1202 = vpack.c.b16 %v1201, %v1201
        %1203 = vrot.lane.b32.xlu0 %v1202, 96
        %v1204 = vpop.permute.xlu0 %1203
        %vm1206 = vcmask 1044224
        %1207 = vst.msk [vmem:[#allocation2] sm:$0xf] %vm1206, %v1204
        %v1208 = vld [vmem:[#allocation2] sm:$0xf]
        %v1209 = vld [vmem:[#allocation11] sm:$0xf]
        %v1210 = vld [vmem:[#allocation11 + $0x4] sm:$0xf]
        %v1211 = vld [vmem:[#allocation11 + $0x8] sm:$0xf]
        %v1212 = vld [vmem:[#allocation11 + $0xc] sm:$0xf]
        %v1213 = vld [vmem:[#allocation11 + $0x10] sm:$0xf]
        %v1214 = vld [vmem:[#allocation11 + $0x14] sm:$0xf]
        %v1215 = vld [vmem:[#allocation11 + $0x18] sm:$0xf]
        %v1216 = vld [vmem:[#allocation11 + $0x1c] sm:$0xf]
        %v1217 = vld [vmem:[#allocation11 + $0x20] sm:$0xf]
        %v1218 = vld [vmem:[#allocation11 + $0x24] sm:$0xf]
        %v1219 = vld [vmem:[#allocation11 + $0x28] sm:$0xf]
        %v1220 = vld [vmem:[#allocation11 + $0x2c] sm:$0xf]
        %v1221 = vld [vmem:[#allocation11 + $0x30] sm:$0xf]
        %v1222 = vld [vmem:[#allocation11 + $0x34] sm:$0xf]
        %v1223 = vld [vmem:[#allocation11 + $0x38] sm:$0xf]
        %v1224 = vld [vmem:[#allocation11 + $0x3c] sm:$0xf]
        %v1241 = vunpack.c.l.b16 %v1209
        %v1242 = vunpack.c.l.b16 %v1210
        %v1243 = vunpack.c.l.b16 %v1211
        %v1244 = vunpack.c.l.b16 %v1212
        %v1245 = vunpack.c.l.b16 %v1213
        %v1246 = vunpack.c.l.b16 %v1214
        %v1247 = vunpack.c.l.b16 %v1215
        %v1248 = vunpack.c.l.b16 %v1216
        %v1249 = vunpack.c.l.b16 %v1217
        %v1250 = vunpack.c.l.b16 %v1218
        %v1251 = vunpack.c.l.b16 %v1219
        %v1252 = vunpack.c.l.b16 %v1220
        %v1253 = vunpack.c.l.b16 %v1221
        %v1254 = vunpack.c.l.b16 %v1222
        %v1255 = vunpack.c.l.b16 %v1223
        %v1256 = vunpack.c.l.b16 %v1224
        %v1257 = vpack.c.b16 %v1242, %v1241
        %v1258 = vpack.c.b16 %v1244, %v1243
        %v1259 = vpack.c.b16 %v1246, %v1245
        %v1260 = vpack.c.b16 %v1248, %v1247
        %v1261 = vpack.c.b16 %v1250, %v1249
        %v1262 = vpack.c.b16 %v1252, %v1251
        %v1263 = vpack.c.b16 %v1254, %v1253
        %v1264 = vpack.c.b16 %v1256, %v1255
        %1273 = vmatprep.subr.bf16.mxu0 0
        %1274 = vmatpush1.bf16.msra.mxu0 %v1257
        %1275 = vmatprep.subr.bf16.mxu0 0
        %1276 = vmatpush1.bf16.msra.mxu0 %v1258
        %1277 = vmatprep.subr.bf16.mxu0 0
        %1278 = vmatpush1.bf16.msra.mxu0 %v1259
        %1279 = vmatprep.subr.bf16.mxu0 0
        %1280 = vmatpush1.bf16.msra.mxu0 %v1260
        %1281 = vmatprep.subr.bf16.mxu0 0
        %1282 = vmatpush1.bf16.msra.mxu0 %v1261
        %1283 = vmatprep.subr.bf16.mxu0 0
        %1284 = vmatpush1.bf16.msra.mxu0 %v1262
        %1285 = vmatprep.subr.bf16.mxu0 0
        %1286 = vmatpush1.bf16.msra.mxu0 %v1263
        %1287 = vmatprep.subr.bf16.mxu0 0
        %1288 = vmatpush1.bf16.msra.mxu0 %v1264
        %1289 = vmatprep.subr.bf16.mxu0 0
        %1290 = vmatpush1.bf16.msra.mxu0 0
        %1291 = vmatprep.subr.bf16.mxu0 0
        %1292 = vmatpush1.bf16.msra.mxu0 0
        %1293 = vmatprep.subr.bf16.mxu0 0
        %1294 = vmatpush1.bf16.msra.mxu0 0
        %1295 = vmatprep.subr.bf16.mxu0 0
        %1296 = vmatpush1.bf16.msra.mxu0 0
        %1297 = vmatprep.subr.bf16.mxu0 0
        %1298 = vmatpush1.bf16.msra.mxu0 0
        %1299 = vmatprep.subr.bf16.mxu0 0
        %1300 = vmatpush1.bf16.msra.mxu0 0
        %1301 = vmatprep.subr.bf16.mxu0 0
        %1302 = vmatpush1.bf16.msra.mxu0 0
        %1303 = vmatprep.subr.bf16.mxu0 0
        %1304 = vmatpush1.bf16.msra.mxu0 0
        %1305 = vmatprep.mubr.bf16.mxu0 0
        %1306 = vmatmul.mubr.bf16.gmra.mrb[0].mxu0 %v1208
        %v1307 = vpop.f32.mrb[0].mxu0
        %v1308 = vadd.f32 0.0, %v1307
        %v1309 = vpop.f32.mrb[0].mxu0
        %v1310 = vpop.f32.mrb[0].mxu0
        %v1311 = vpop.f32.mrb[0].mxu0
        %1312 = vdwg.mxu0
        %v1313 = vadd.f32 %v492, %v1308
        %v1314 = vld [vmem:[#allocation12] sm:$0x1]
        %v1315 = vld [vmem:[#allocation14] sm:$0x1]
        %1316 = vadd.xlane.f32.xlu0 %v1313
        %v1317 = vpop.xlane.xlu0 %1316
        %v1318 = vmul.f32 %v1317, %v462
        %v1319 = vsub.f32 %v1313, %v1318
        %v1320 = vmul.f32 %v1319, %v1319
        %1321 = vadd.xlane.f32.xlu0 %v1320
        %v1322 = vpop.xlane.xlu0 %1321
        %v1323 = vmul.f32 %v1322, 0.007874016
        %v1324 = vrsqrt.pop %v1323
        %v1325 = vmul.f32 %v1323, %v1324
        %vm1326 = vcmp.eq.f32.partialorder %v1323, inf
        %v1327 = vsel %vm1326, %v1323, %v1325
        %vm1328 = vcmp.eq.f32.partialorder %v1323, 0.0
        %v1329 = vand.u32 %v1323, 2147483648
        %v1330 = vsel %vm1328, %v1329, %v1327
        %v1331 = vadd.f32 %v1330, 1e-06
        %v1332 = vrcp.pop %v1331
        %v1333 = vmul.f32 %v1319, %v1332
        %v1335 = vlaneseq
        %v1336 = vshrl.u32 %v1335, 7
        %v1337 = vsub.s32 0, %v1336
        %v1338 = vrot.slane %v1314, %v1337
        %v1340 = vmul.f32 %v1338, %v1333
        %v1342 = vlaneseq
        %v1343 = vshrl.u32 %v1342, 7
        %v1344 = vsub.s32 0, %v1343
        %v1345 = vrot.slane %v1315, %v1344
        %v1347 = vadd.f32 %v1340, %v1345
        %v1348 = vpack.c.bf16 %v1347, %v1347
        %v1349 = vld [vmem:[#allocation15] sm:$0xf]
        %v1350 = vld [vmem:[#allocation15 + $0x4] sm:$0xf]
        %v1351 = vld [vmem:[#allocation15 + $0x8] sm:$0xf]
        %v1352 = vld [vmem:[#allocation15 + $0xc] sm:$0xf]
        %v1353 = vld [vmem:[#allocation15 + $0x10] sm:$0xf]
        %v1354 = vld [vmem:[#allocation15 + $0x14] sm:$0xf]
        %v1355 = vld [vmem:[#allocation15 + $0x18] sm:$0xf]
        %v1356 = vld [vmem:[#allocation15 + $0x1c] sm:$0xf]
        %v1357 = vld [vmem:[#allocation15 + $0x20] sm:$0xf]
        %v1358 = vld [vmem:[#allocation15 + $0x24] sm:$0xf]
        %v1359 = vld [vmem:[#allocation15 + $0x28] sm:$0xf]
        %v1360 = vld [vmem:[#allocation15 + $0x2c] sm:$0xf]
        %v1361 = vld [vmem:[#allocation15 + $0x30] sm:$0xf]
        %v1362 = vld [vmem:[#allocation15 + $0x34] sm:$0xf]
        %v1363 = vld [vmem:[#allocation15 + $0x38] sm:$0xf]
        %v1364 = vld [vmem:[#allocation15 + $0x3c] sm:$0xf]
        %v1381 = vunpack.c.l.b16 %v1349
        %v1382 = vunpack.c.l.b16 %v1350
        %v1383 = vunpack.c.l.b16 %v1351
        %v1384 = vunpack.c.l.b16 %v1352
        %v1385 = vunpack.c.l.b16 %v1353
        %v1386 = vunpack.c.l.b16 %v1354
        %v1387 = vunpack.c.l.b16 %v1355
        %v1388 = vunpack.c.l.b16 %v1356
        %v1389 = vunpack.c.l.b16 %v1357
        %v1390 = vunpack.c.l.b16 %v1358
        %v1391 = vunpack.c.l.b16 %v1359
        %v1392 = vunpack.c.l.b16 %v1360
        %v1393 = vunpack.c.l.b16 %v1361
        %v1394 = vunpack.c.l.b16 %v1362
        %v1395 = vunpack.c.l.b16 %v1363
        %v1396 = vunpack.c.l.b16 %v1364
        %v1397 = vpack.c.b16 %v1382, %v1381
        %v1398 = vpack.c.b16 %v1384, %v1383
        %v1399 = vpack.c.b16 %v1386, %v1385
        %v1400 = vpack.c.b16 %v1388, %v1387
        %v1401 = vpack.c.b16 %v1390, %v1389
        %v1402 = vpack.c.b16 %v1392, %v1391
        %v1403 = vpack.c.b16 %v1394, %v1393
        %v1404 = vpack.c.b16 %v1396, %v1395
        %1413 = vmatprep.subr.bf16.mxu0 0
        %1414 = vmatpush1.bf16.msra.mxu0 %v1397
        %1415 = vmatprep.subr.bf16.mxu0 0
        %1416 = vmatpush1.bf16.msra.mxu0 %v1398
        %1417 = vmatprep.subr.bf16.mxu0 0
        %1418 = vmatpush1.bf16.msra.mxu0 %v1399
        %1419 = vmatprep.subr.bf16.mxu0 0
        %1420 = vmatpush1.bf16.msra.mxu0 %v1400
        %1421 = vmatprep.subr.bf16.mxu0 0
        %1422 = vmatpush1.bf16.msra.mxu0 %v1401
        %1423 = vmatprep.subr.bf16.mxu0 0
        %1424 = vmatpush1.bf16.msra.mxu0 %v1402
        %1425 = vmatprep.subr.bf16.mxu0 0
        %1426 = vmatpush1.bf16.msra.mxu0 %v1403
        %1427 = vmatprep.subr.bf16.mxu0 0
        %1428 = vmatpush1.bf16.msra.mxu0 %v1404
        %1429 = vmatprep.subr.bf16.mxu0 0
        %1430 = vmatpush1.bf16.msra.mxu0 0
        %1431 = vmatprep.subr.bf16.mxu0 0
        %1432 = vmatpush1.bf16.msra.mxu0 0
        %1433 = vmatprep.subr.bf16.mxu0 0
        %1434 = vmatpush1.bf16.msra.mxu0 0
        %1435 = vmatprep.subr.bf16.mxu0 0
        %1436 = vmatpush1.bf16.msra.mxu0 0
        %1437 = vmatprep.subr.bf16.mxu0 0
        %1438 = vmatpush1.bf16.msra.mxu0 0
        %1439 = vmatprep.subr.bf16.mxu0 0
        %1440 = vmatpush1.bf16.msra.mxu0 0
        %1441 = vmatprep.subr.bf16.mxu0 0
        %1442 = vmatpush1.bf16.msra.mxu0 0
        %1443 = vmatprep.subr.bf16.mxu0 0
        %1444 = vmatpush1.bf16.msra.mxu0 0
        %1445 = vmatprep.mubr.bf16.mxu0 0
        %1446 = vmatmul.mubr.bf16.gmra.mrb[0].mxu0 %v1348
        %v1447 = vpop.f32.mrb[0].mxu0
        %v1448 = vadd.f32 0.0, %v1447
        %v1449 = vpop.f32.mrb[0].mxu0
        %v1450 = vpop.f32.mrb[0].mxu0
        %v1451 = vpop.f32.mrb[0].mxu0
        %1452 = vdwg.mxu0
        %v1453 = vmax.f32 %v1448, 0.0
        %v1454 = vpack.c.bf16 %v1453, %v1453
        %v1455 = vld [vmem:[#allocation17] sm:$0xf]
        %v1456 = vld [vmem:[#allocation17 + $0x4] sm:$0xf]
        %v1457 = vld [vmem:[#allocation17 + $0x8] sm:$0xf]
        %v1458 = vld [vmem:[#allocation17 + $0xc] sm:$0xf]
        %v1459 = vld [vmem:[#allocation17 + $0x10] sm:$0xf]
        %v1460 = vld [vmem:[#allocation17 + $0x14] sm:$0xf]
        %v1461 = vld [vmem:[#allocation17 + $0x18] sm:$0xf]
        %v1462 = vld [vmem:[#allocation17 + $0x1c] sm:$0xf]
        %v1463 = vld [vmem:[#allocation17 + $0x20] sm:$0xf]
        %v1464 = vld [vmem:[#allocation17 + $0x24] sm:$0xf]
        %v1465 = vld [vmem:[#allocation17 + $0x28] sm:$0xf]
        %v1466 = vld [vmem:[#allocation17 + $0x2c] sm:$0xf]
        %v1467 = vld [vmem:[#allocation17 + $0x30] sm:$0xf]
        %v1468 = vld [vmem:[#allocation17 + $0x34] sm:$0xf]
        %v1469 = vld [vmem:[#allocation17 + $0x38] sm:$0xf]
        %v1470 = vld [vmem:[#allocation17 + $0x3c] sm:$0xf]
        %v1487 = vunpack.c.l.b16 %v1455
        %v1488 = vunpack.c.l.b16 %v1456
        %v1489 = vunpack.c.l.b16 %v1457
        %v1490 = vunpack.c.l.b16 %v1458
        %v1491 = vunpack.c.l.b16 %v1459
        %v1492 = vunpack.c.l.b16 %v1460
        %v1493 = vunpack.c.l.b16 %v1461
        %v1494 = vunpack.c.l.b16 %v1462
        %v1495 = vunpack.c.l.b16 %v1463
        %v1496 = vunpack.c.l.b16 %v1464
        %v1497 = vunpack.c.l.b16 %v1465
        %v1498 = vunpack.c.l.b16 %v1466
        %v1499 = vunpack.c.l.b16 %v1467
        %v1500 = vunpack.c.l.b16 %v1468
        %v1501 = vunpack.c.l.b16 %v1469
        %v1502 = vunpack.c.l.b16 %v1470
        %v1503 = vpack.c.b16 %v1488, %v1487
        %v1504 = vpack.c.b16 %v1490, %v1489
        %v1505 = vpack.c.b16 %v1492, %v1491
        %v1506 = vpack.c.b16 %v1494, %v1493
        %v1507 = vpack.c.b16 %v1496, %v1495
        %v1508 = vpack.c.b16 %v1498, %v1497
        %v1509 = vpack.c.b16 %v1500, %v1499
        %v1510 = vpack.c.b16 %v1502, %v1501
        %1519 = vmatprep.subr.bf16.mxu0 0
        %1520 = vmatpush1.bf16.msra.mxu0 %v1503
        %1521 = vmatprep.subr.bf16.mxu0 0
        %1522 = vmatpush1.bf16.msra.mxu0 %v1504
        %1523 = vmatprep.subr.bf16.mxu0 0
        %1524 = vmatpush1.bf16.msra.mxu0 %v1505
        %1525 = vmatprep.subr.bf16.mxu0 0
        %1526 = vmatpush1.bf16.msra.mxu0 %v1506
        %1527 = vmatprep.subr.bf16.mxu0 0
        %1528 = vmatpush1.bf16.msra.mxu0 %v1507
        %1529 = vmatprep.subr.bf16.mxu0 0
        %1530 = vmatpush1.bf16.msra.mxu0 %v1508
        %1531 = vmatprep.subr.bf16.mxu0 0
        %1532 = vmatpush1.bf16.msra.mxu0 %v1509
        %1533 = vmatprep.subr.bf16.mxu0 0
        %1534 = vmatpush1.bf16.msra.mxu0 %v1510
        %1535 = vmatprep.subr.bf16.mxu0 0
        %1536 = vmatpush1.bf16.msra.mxu0 0
        %1537 = vmatprep.subr.bf16.mxu0 0
        %1538 = vmatpush1.bf16.msra.mxu0 0
        %1539 = vmatprep.subr.bf16.mxu0 0
        %1540 = vmatpush1.bf16.msra.mxu0 0
        %1541 = vmatprep.subr.bf16.mxu0 0
        %1542 = vmatpush1.bf16.msra.mxu0 0
        %1543 = vmatprep.subr.bf16.mxu0 0
        %1544 = vmatpush1.bf16.msra.mxu0 0
        %1545 = vmatprep.subr.bf16.mxu0 0
        %1546 = vmatpush1.bf16.msra.mxu0 0
        %1547 = vmatprep.subr.bf16.mxu0 0
        %1548 = vmatpush1.bf16.msra.mxu0 0
        %1549 = vmatprep.subr.bf16.mxu0 0
        %1550 = vmatpush1.bf16.msra.mxu0 0
        %1551 = vmatprep.mubr.bf16.mxu0 0
        %1552 = vmatmul.mubr.bf16.gmra.mrb[0].mxu0 %v1454
        %v1553 = vpop.f32.mrb[0].mxu0
        %v1554 = vadd.f32 0.0, %v1553
        %v1555 = vpop.f32.mrb[0].mxu0
        %v1556 = vpop.f32.mrb[0].mxu0
        %v1557 = vpop.f32.mrb[0].mxu0
        %1558 = vdwg.mxu0
        %v1559 = vadd.f32 %v1313, %v1554
        %1560 = vst [vmem:[%s455] sm:$0xff] %v1559
        %s1561 = sand.u32 %s232, 1
        %s1562 = scalar_lea.sflag [#allocation5], %s1561
        %s1563 = sand.u32 %s232, 1
        %s1564 = smul.addr %s1563, 8
        %s1565 = scalar_lea.vmem [#allocation18], %s1564
        // Predicated region
        $region93: #{tpu_custom_call.1} parent=55 // pred_check
          %p1566 = pneg %p242
        $region94: #{tpu_custom_call.1} parent=55 // pred_check_branch
          %1568 = sbr.rel (%p1566) target = $region96
        $region95: #{tpu_custom_call.1} parent=55 // pred_region
          %s1570 = ssub.s32 128, 128
          %1571 = vsyncadd %s1562, %s1570
          %s1572 = smul.addr %s30, 128
          %s1573 = scalar_lea.hbm %s9, %s1572
          %s1575 = sshll.u32 %s1565, 4
          %s1576 = int_to_ptr.vmem [resolvable:$true] %s1575
          %1578 = dma.vmem_to_hbm [thread:$0]  %s1576, 128, %s1573, %s1562
        $region96: #{tpu_custom_call.1} parent=55 // pred_fallthru
          _
      $region56: #{tpu_custom_call.1} parent=5 // pred_fallthru
        _
      %p1579 = scmp.le.s32.totalorder 2, %s25
      // Predicated region
      $region97: #{tpu_custom_call.1} parent=5 // pred_check
        %p1580 = pneg %p1579
      $region98: #{tpu_custom_call.1} parent=5 // pred_check_branch
        %1582 = sbr.rel (%p1580) target = $region100
      $region99: #{tpu_custom_call.1} parent=5 // pred_region
        %s1583 = ssub.s32 %s25, 2
        // Predicated region
        $region101: #{tpu_custom_call.1} parent=99 // pred_check
          %p1584 = pneg %p248
        $region102: #{tpu_custom_call.1} parent=99 // pred_check_branch
          %1586 = sbr.rel (%p1584) target = $region104
        $region103: #{tpu_custom_call.1} parent=99 // pred_region
          %s1587 = sand.u32 %s233, 1
          %s1588 = scalar_lea.sflag [#allocation5], %s1587
          %s1589 = sand.u32 %s233, 1
          %s1590 = smul.addr %s1589, 8
          %s1591 = scalar_lea.vmem [#allocation18], %s1590
          %1592 = dma.done %s1588, 128
        $region104: #{tpu_custom_call.1} parent=99 // pred_fallthru
          _
      $region100: #{tpu_custom_call.1} parent=5 // pred_fallthru
        _
    $region6: #{tpu_custom_call.1} parent=1 // loop_footer
      %s29 = sadd.s32 1, %s25
    $region7: #{tpu_custom_call.1} parent=1 // loop_footer_branch
      %24 = sbr.rel target = $region3
    $region8: #{tpu_custom_call.1} parent=1 // loop_exit
      _
    %1593 = vsyncpa [#allocation4], 1
    %s1594 = scalar_lea.sflag [#allocation4], 1
    %1595 = vsyncpa %s1594, 1
    %1596 = vsyncpa [#allocation7], 1
    %1597 = vsyncpa [#allocation10], 1
    %1598 = vsyncpa [#allocation13], 1
    %1599 = vsyncpa [#allocation16], 1
    %1600 = vsyncpa [#allocation5], 1
    %s1601 = scalar_lea.sflag [#allocation5], 1
    %1602 = vsyncpa %s1601, 1

</llo_original>
